<compile_context>
chip_gen: v5e
topology: v5e:2x2
jax: 0.10.0
libtpu: 0.0.40
codegen_flags: <defaults>
</compile_context>

<pallas_src>
import functools

import jax
import jax.numpy as jnp
import numpy as np
from jax import lax
from jax.experimental import pallas as pl
from jax.experimental.pallas import tpu as pltpu

hidden_dim = 64
latent_dim = 32
input_dim = 16

BP = 8  # padded batch: one sublane tile


# ----------------------------------------------------------------------------
# Parameter-slab layout: every section starts on an 8-row boundary so the
# in-kernel static slices never cut an (8, 128) tile along sublanes.
# ----------------------------------------------------------------------------
def _round8(n):
    return (n + 7) // 8 * 8


def _slab_layout(D, H, L):
    layout = {}
    r = 0

    def add(name, rows, cols):
        nonlocal r
        layout[name] = (r, rows, cols)
        r += _round8(rows)

    add("wih_e", D, 4 * H)   # encoder input->gate weights (transposed)
    add("whh_e", H, 4 * H)   # encoder hidden->gate weights (transposed)
    add("b_e", 1, 4 * H)     # encoder combined gate bias (b_ih + b_hh)
    add("w1", H, L)          # hidden_to_latent weight (transposed)
    add("b1", 1, L)
    add("w2", L, D)          # latent_to_hidden weight (transposed)
    add("b2", 1, D)
    add("whh_d", D, 4 * D)   # decoder hidden->gate weights (transposed)
    add("b_d", 1, 4 * D)     # decoder combined gate bias
    return layout, r


# ----------------------------------------------------------------------------
# Pallas kernel: full forward pass of the autoencoder.
# ----------------------------------------------------------------------------
def rnn_ae_kernel(x_ref, p_ref, y_ref, *, D, H, L, T, B, layout):
    # x_ref: (T*B, D) time-major flattened (batch padded to B = 8)
    # p_ref: (rows, 4H) packed parameter slab
    # y_ref: (B, T*D) reconstructed sequence, lane-dense

    def ld(name):
        off, rows, cols = layout[name]
        return p_ref[off:off + rows, :cols]

    wih_e = ld("wih_e")                              # (D, 4H)  f32
    whh_e = ld("whh_e").astype(jnp.bfloat16)         # (H, 4H)  bf16 (recurrence)
    b_e = ld("b_e")                                  # (1, 4H)
    w1 = ld("w1")                                    # (H, L)
    b1 = ld("b1")                                    # (1, L)
    w2 = ld("w2")                                    # (L, D)
    b2 = ld("b2")                                    # (1, D)
    whh_d = ld("whh_d").astype(jnp.bfloat16)         # (D, 4D)  bf16 (recurrence)
    b_d = ld("b_d")                                  # (1, 4D)

    # ---- encoder: input projection hoisted out of the recurrence ----------
    # One (T*B, D) @ (D, 4H) MXU op; combined bias folded in once.  Kept f32
    # (runs once, off the serial chain).
    x_proj = (
        jnp.dot(x_ref[...], wih_e, preferred_element_type=jnp.float32) + b_e
    )                                                # (T*B, 4H)

    h = jnp.zeros((B, H), jnp.float32)
    c = jnp.zeros((B, H), jnp.float32)

    # Fully unrolled recurrence: one packed bf16 (B, 4H) matmul per step.
    # B = 8, so every slice start t*B is sublane-tile aligned.
    for t in range(T):
        gates = x_proj[t * B:(t + 1) * B, :] + jnp.dot(
            h.astype(jnp.bfloat16), whh_e, preferred_element_type=jnp.float32
        )                                            # (B, 4H) f32
        # vreg-aligned nonlinearities: sigmoid on all 4H lanes (2 full vregs),
        # tanh on the upper 2H lanes (1 full vreg); slice afterwards.
        sig = jax.nn.sigmoid(gates)
        tnh = jnp.tanh(gates[:, 2 * H:])
        i_g = sig[:, :H]
        f_g = sig[:, H:2 * H]
        o_g = sig[:, 3 * H:]
        g_t = tnh[:, :H]
        c = f_g * c + i_g * g_t
        h = o_g * jnp.tanh(c)

    # ---- latent bottleneck (runs once; exact f32) --------------------------
    latent = jnp.dot(h, w1, preferred_element_type=jnp.float32) + b1
    h_d = jnp.dot(latent, w2, preferred_element_type=jnp.float32) + b2
    c_d = jnp.zeros((B, D), jnp.float32)

    # ---- decoder LSTM -------------------------------------------------------
    # PyTorch feeds an all-zeros decoder input, so the x @ W_ih term is
    # identically zero and omitted (identical semantics).
    outs = []
    for t in range(T):
        gates = jnp.dot(
            h_d.astype(jnp.bfloat16), whh_d, preferred_element_type=jnp.float32
        ) + b_d                                      # (B, 4D)
        sig = jax.nn.sigmoid(gates)
        tnh = jnp.tanh(gates[:, 2 * D:])
        i_g = sig[:, :D]
        f_g = sig[:, D:2 * D]
        o_g = sig[:, 3 * D:]
        g_t = tnh[:, :D]
        c_d = f_g * c_d + i_g * g_t
        h_d = o_g * jnp.tanh(c_d)
        outs.append(h_d)

    # Single lane-dense store: (B, T*D) = (8, 128) at the test shape.
    y_ref[...] = jnp.concatenate(outs, axis=-1)


# ----------------------------------------------------------------------------
# Wrapper factory (static shape closure, jitted forward).
# ----------------------------------------------------------------------------
def make_forward(D, H, L, T, B):
    layout, _ = _slab_layout(D, H, L)
    kernel = functools.partial(
        rnn_ae_kernel, D=D, H=H, L=L, T=T, B=BP, layout=layout
    )
    vmem = pl.BlockSpec(memory_space=pltpu.MemorySpace.VMEM)

    # NOTE: whole problem (~250 KB) is VMEM-resident; no grid needed.  If B/T
    # grow, add a batch-block grid with dimension_semantics=("parallel",) to
    # use both v7x TensorCores and stay under the scoped-VMEM default.
    @jax.jit
    def forward(x, slab):
        # zero-pad batch to BP = 8 rows, then flatten time-major for one big
        # input-projection matmul; padded rows are discarded on the way out.
        xp = jnp.zeros((BP, T, D), x.dtype).at[:B].set(x)
        x_flat = jnp.transpose(xp, (1, 0, 2)).reshape(T * BP, D)
        y_flat = pl.pallas_call(
            kernel,
            out_shape=jax.ShapeDtypeStruct((BP, T * D), jnp.float32),
            in_specs=[vmem, vmem],
            out_specs=vmem,
        )(x_flat, slab)
        return y_flat[:B].reshape(B, T, D)

    return forward


# ----------------------------------------------------------------------------
# Parameter initialization (deterministic, PyTorch-style uniform(-k, k))
# ----------------------------------------------------------------------------
def init_lstm(key, in_size, hid_size):
    k = 1.0 / np.sqrt(hid_size)
    k0, k1, k2, k3 = jax.random.split(key, 4)
    w_ih = jax.random.uniform(k0, (4 * hid_size, in_size), jnp.float32, -k, k)
    w_hh = jax.random.uniform(k1, (4 * hid_size, hid_size), jnp.float32, -k, k)
    b_ih = jax.random.uniform(k2, (4 * hid_size,), jnp.float32, -k, k)
    b_hh = jax.random.uniform(k3, (4 * hid_size,), jnp.float32, -k, k)
    return w_ih, w_hh, b_ih, b_hh


def init_linear(key, in_size, out_size):
    k = 1.0 / np.sqrt(in_size)
    k0, k1 = jax.random.split(key)
    w = jax.random.uniform(k0, (out_size, in_size), jnp.float32, -k, k)
    b = jax.random.uniform(k1, (out_size,), jnp.float32, -k, k)
    return w, b


def pack_param_slab(e_wih, e_whh, e_bih, e_bhh, w1, b1, w2, b2,
                    d_wih, d_whh, d_bih, d_bhh, *, D, H, L):
    """Pack all parameters into one lane-padded f32 slab (one DMA per call).

    PyTorch gate order (i, f, g, o) is preserved by transposing the stacked
    (4H, in) weights so gates lie contiguously along lanes; the two LSTM
    biases are combined.  The decoder W_ih is never used (zero decoder input).
    """
    layout, rows = _slab_layout(D, H, L)
    slab = np.zeros((rows, 4 * H), np.float32)

    def put(name, arr):
        off, r, c = layout[name]
        slab[off:off + r, :c] = np.asarray(arr, np.float32).reshape(r, c)

    put("wih_e", np.asarray(e_wih).T)
    put("whh_e", np.asarray(e_whh).T)
    put("b_e", np.asarray(e_bih) + np.asarray(e_bhh))
    put("w1", np.asarray(w1).T)
    put("b1", b1)
    put("w2", np.asarray(w2).T)
    put("b2", b2)
    put("whh_d", np.asarray(d_whh).T)
    put("b_d", np.asarray(d_bih) + np.asarray(d_bhh))
    return jnp.asarray(slab)


# ----------------------------------------------------------------------------
# Pure-JAX f32 reference (correctness check)
# ----------------------------------------------------------------------------
def lstm_ref(x, w_ih, w_hh, b_ih, b_hh, h0, c0):
    def step(carry, x_t):
        h, c = carry
        gates = x_t @ w_ih.T + h @ w_hh.T + b_ih + b_hh
        i, f, g, o = jnp.split(gates, 4, axis=-1)
        c = jax.nn.sigmoid(f) * c + jax.nn.sigmoid(i) * jnp.tanh(g)
        h = jax.nn.sigmoid(o) * jnp.tanh(c)
        return (h, c), h

    (h, c), hs = lax.scan(step, (h0, c0), jnp.swapaxes(x, 0, 1))
    return jnp.swapaxes(hs, 0, 1), h, c


def forward_ref(x, raw, hid):
    (e_wih, e_whh, e_bih, e_bhh, w1, b1, w2, b2, d_wih, d_whh, d_bih, d_bhh) = raw
    B, T, D = x.shape
    z = jnp.zeros((B, hid), jnp.float32)
    _, h_last, _ = lstm_ref(x, e_wih, e_whh, e_bih, e_bhh, z, z)
    latent = h_last @ w1.T + b1
    h_dec = latent @ w2.T + b2
    c_dec = jnp.zeros_like(h_dec)
    dec_in = jnp.zeros((B, T, hid), jnp.float32)
    y, _, _ = lstm_ref(dec_in, d_wih, d_whh, d_bih, d_bhh, h_dec, c_dec)
    return y


# ----------------------------------------------------------------------------
if __name__ == "__main__":
    D, H, L = input_dim, hidden_dim, latent_dim
    B, T = 4, 8

    key = jax.random.PRNGKey(0)
    kx, ke, k1, k2, kd = jax.random.split(key, 5)

    x = jax.random.normal(kx, (B, T, D), jnp.float32)

    e_wih, e_whh, e_bih, e_bhh = init_lstm(ke, D, H)
    w1, b1 = init_linear(k1, H, L)
    w2, b2 = init_linear(k2, L, D)
    d_wih, d_whh, d_bih, d_bhh = init_lstm(kd, H, D)

    slab = pack_param_slab(
        e_wih, e_whh, e_bih, e_bhh, w1, b1, w2, b2,
        d_wih, d_whh, d_bih, d_bhh, D=D, H=H, L=L,
    )

    forward = make_forward(D, H, L, T, B)
    y = jax.block_until_ready(forward(x, slab))

    y_ref = forward_ref(
        x,
        (e_wih, e_whh, e_bih, e_bhh, w1, b1, w2, b2, d_wih, d_whh, d_bih, d_bhh),
        H,
    )
    # Tolerance relaxed relative to the pure-f32 version because the 16 serial
    # recurrence matmuls now run in single-pass bf16 (intentional trade-off).
    np.testing.assert_allclose(np.asarray(y), np.asarray(y_ref), atol=5e-2, rtol=5e-2)

    print("KERNEL_OK")
</pallas_src>

<mosaic_0001>
module attributes {stable_mosaic.version = 11 : i64} {
  func.func @rnn_ae_kernel(%arg0: memref<64x16xf32, #tpu.memory_space<vmem>>, %arg1: memref<224x256xf32, #tpu.memory_space<vmem>>, %arg2: memref<8x128xf32, #tpu.memory_space<vmem>>) attributes {dimension_semantics = [], scalar_prefetch = 0 : i64, scratch_operands = 0 : i64, tpu.core_type = #tpu.core_type<tc>} {
    %c0 = arith.constant 0 : index
    %c0_0 = arith.constant 0 : index
    %0 = vector.load %arg1[%c0, %c0_0] : memref<224x256xf32, #tpu.memory_space<vmem>>, vector<16x256xf32>
    %c16 = arith.constant 16 : index
    %c0_1 = arith.constant 0 : index
    %1 = vector.load %arg1[%c16, %c0_1] : memref<224x256xf32, #tpu.memory_space<vmem>>, vector<64x256xf32>
    %2 = arith.truncf %1 : vector<64x256xf32> to vector<64x256xbf16>
    %c80 = arith.constant 80 : index
    %c0_2 = arith.constant 0 : index
    %3 = vector.load %arg1[%c80, %c0_2] : memref<224x256xf32, #tpu.memory_space<vmem>>, vector<1x256xf32>
    %c88 = arith.constant 88 : index
    %c0_3 = arith.constant 0 : index
    %4 = vector.load %arg1[%c88, %c0_3] : memref<224x256xf32, #tpu.memory_space<vmem>>, vector<64x32xf32>
    %c152 = arith.constant 152 : index
    %c0_4 = arith.constant 0 : index
    %5 = vector.load %arg1[%c152, %c0_4] : memref<224x256xf32, #tpu.memory_space<vmem>>, vector<1x32xf32>
    %c160 = arith.constant 160 : index
    %c0_5 = arith.constant 0 : index
    %6 = vector.load %arg1[%c160, %c0_5] : memref<224x256xf32, #tpu.memory_space<vmem>>, vector<32x16xf32>
    %c192 = arith.constant 192 : index
    %c0_6 = arith.constant 0 : index
    %7 = vector.load %arg1[%c192, %c0_6] : memref<224x256xf32, #tpu.memory_space<vmem>>, vector<1x16xf32>
    %c200 = arith.constant 200 : index
    %c0_7 = arith.constant 0 : index
    %8 = vector.load %arg1[%c200, %c0_7] : memref<224x256xf32, #tpu.memory_space<vmem>>, vector<16x64xf32>
    %9 = arith.truncf %8 : vector<16x64xf32> to vector<16x64xbf16>
    %c216 = arith.constant 216 : index
    %c0_8 = arith.constant 0 : index
    %10 = vector.load %arg1[%c216, %c0_8] : memref<224x256xf32, #tpu.memory_space<vmem>>, vector<1x64xf32>
    %c0_9 = arith.constant 0 : index
    %c0_10 = arith.constant 0 : index
    %11 = vector.load %arg0[%c0_9, %c0_10] : memref<64x16xf32, #tpu.memory_space<vmem>>, vector<64x16xf32>
    %cst = arith.constant dense<0.000000e+00> : vector<64x256xf32>
    %12 = tpu.matmul %11, %0, %cst {dimension_numbers = #tpu.dot_dimension_numbers<[1], [0], [0], [1], [0, 0, 1, 1], [], []>} : vector<64x16xf32>, vector<16x256xf32>, vector<64x256xf32> -> vector<64x256xf32>
    %13 = vector.broadcast %3 : vector<1x256xf32> to vector<64x256xf32>
    %14 = arith.addf %12, %13 : vector<64x256xf32>
    %cst_11 = arith.constant 0.000000e+00 : f32
    %15 = vector.broadcast %cst_11 : f32 to vector<8x64xf32>
    %cst_12 = arith.constant 0.000000e+00 : f32
    %16 = vector.broadcast %cst_12 : f32 to vector<8x64xf32>
    %17 = vector.extract_strided_slice %14 {offsets = [0, 0], sizes = [8, 256], strides = [1, 1]} : vector<64x256xf32> to vector<8x256xf32>
    %18 = arith.truncf %15 : vector<8x64xf32> to vector<8x64xbf16>
    %cst_13 = arith.constant dense<0.000000e+00> : vector<8x256xf32>
    %19 = tpu.matmul %18, %2, %cst_13 {dimension_numbers = #tpu.dot_dimension_numbers<[1], [0], [0], [1], [0, 0, 1, 1], [], []>} : vector<8x64xbf16>, vector<64x256xbf16>, vector<8x256xf32> -> vector<8x256xf32>
    %20 = arith.addf %17, %19 : vector<8x256xf32>
    %21 = arith.negf %20 : vector<8x256xf32>
    %22 = math.exp %21 : vector<8x256xf32>
    %cst_14 = arith.constant 1.000000e+00 : f32
    %23 = vector.broadcast %cst_14 : f32 to vector<8x256xf32>
    %24 = arith.addf %23, %22 : vector<8x256xf32>
    %25 = arith.divf %23, %24 : vector<8x256xf32>
    %26 = vector.extract_strided_slice %20 {offsets = [0, 128], sizes = [8, 128], strides = [1, 1]} : vector<8x256xf32> to vector<8x128xf32>
    %27 = math.tanh %26 : vector<8x128xf32>
    %28 = vector.extract_strided_slice %25 {offsets = [0, 0], sizes = [8, 64], strides = [1, 1]} : vector<8x256xf32> to vector<8x64xf32>
    %29 = vector.extract_strided_slice %25 {offsets = [0, 64], sizes = [8, 64], strides = [1, 1]} : vector<8x256xf32> to vector<8x64xf32>
    %30 = vector.extract_strided_slice %25 {offsets = [0, 192], sizes = [8, 64], strides = [1, 1]} : vector<8x256xf32> to vector<8x64xf32>
    %31 = vector.extract_strided_slice %27 {offsets = [0, 0], sizes = [8, 64], strides = [1, 1]} : vector<8x128xf32> to vector<8x64xf32>
    %32 = arith.mulf %29, %16 : vector<8x64xf32>
    %33 = arith.mulf %28, %31 : vector<8x64xf32>
    %34 = arith.addf %32, %33 : vector<8x64xf32>
    %35 = math.tanh %34 : vector<8x64xf32>
    %36 = arith.mulf %30, %35 : vector<8x64xf32>
    %37 = vector.extract_strided_slice %14 {offsets = [8, 0], sizes = [8, 256], strides = [1, 1]} : vector<64x256xf32> to vector<8x256xf32>
    %38 = arith.truncf %36 : vector<8x64xf32> to vector<8x64xbf16>
    %cst_15 = arith.constant dense<0.000000e+00> : vector<8x256xf32>
    %39 = tpu.matmul %38, %2, %cst_15 {dimension_numbers = #tpu.dot_dimension_numbers<[1], [0], [0], [1], [0, 0, 1, 1], [], []>} : vector<8x64xbf16>, vector<64x256xbf16>, vector<8x256xf32> -> vector<8x256xf32>
    %40 = arith.addf %37, %39 : vector<8x256xf32>
    %41 = arith.negf %40 : vector<8x256xf32>
    %42 = math.exp %41 : vector<8x256xf32>
    %cst_16 = arith.constant 1.000000e+00 : f32
    %43 = vector.broadcast %cst_16 : f32 to vector<8x256xf32>
    %44 = arith.addf %43, %42 : vector<8x256xf32>
    %45 = arith.divf %43, %44 : vector<8x256xf32>
    %46 = vector.extract_strided_slice %40 {offsets = [0, 128], sizes = [8, 128], strides = [1, 1]} : vector<8x256xf32> to vector<8x128xf32>
    %47 = math.tanh %46 : vector<8x128xf32>
    %48 = vector.extract_strided_slice %45 {offsets = [0, 0], sizes = [8, 64], strides = [1, 1]} : vector<8x256xf32> to vector<8x64xf32>
    %49 = vector.extract_strided_slice %45 {offsets = [0, 64], sizes = [8, 64], strides = [1, 1]} : vector<8x256xf32> to vector<8x64xf32>
    %50 = vector.extract_strided_slice %45 {offsets = [0, 192], sizes = [8, 64], strides = [1, 1]} : vector<8x256xf32> to vector<8x64xf32>
    %51 = vector.extract_strided_slice %47 {offsets = [0, 0], sizes = [8, 64], strides = [1, 1]} : vector<8x128xf32> to vector<8x64xf32>
    %52 = arith.mulf %49, %34 : vector<8x64xf32>
    %53 = arith.mulf %48, %51 : vector<8x64xf32>
    %54 = arith.addf %52, %53 : vector<8x64xf32>
    %55 = math.tanh %54 : vector<8x64xf32>
    %56 = arith.mulf %50, %55 : vector<8x64xf32>
    %57 = vector.extract_strided_slice %14 {offsets = [16, 0], sizes = [8, 256], strides = [1, 1]} : vector<64x256xf32> to vector<8x256xf32>
    %58 = arith.truncf %56 : vector<8x64xf32> to vector<8x64xbf16>
    %cst_17 = arith.constant dense<0.000000e+00> : vector<8x256xf32>
    %59 = tpu.matmul %58, %2, %cst_17 {dimension_numbers = #tpu.dot_dimension_numbers<[1], [0], [0], [1], [0, 0, 1, 1], [], []>} : vector<8x64xbf16>, vector<64x256xbf16>, vector<8x256xf32> -> vector<8x256xf32>
    %60 = arith.addf %57, %59 : vector<8x256xf32>
    %61 = arith.negf %60 : vector<8x256xf32>
    %62 = math.exp %61 : vector<8x256xf32>
    %cst_18 = arith.constant 1.000000e+00 : f32
    %63 = vector.broadcast %cst_18 : f32 to vector<8x256xf32>
    %64 = arith.addf %63, %62 : vector<8x256xf32>
    %65 = arith.divf %63, %64 : vector<8x256xf32>
    %66 = vector.extract_strided_slice %60 {offsets = [0, 128], sizes = [8, 128], strides = [1, 1]} : vector<8x256xf32> to vector<8x128xf32>
    %67 = math.tanh %66 : vector<8x128xf32>
    %68 = vector.extract_strided_slice %65 {offsets = [0, 0], sizes = [8, 64], strides = [1, 1]} : vector<8x256xf32> to vector<8x64xf32>
    %69 = vector.extract_strided_slice %65 {offsets = [0, 64], sizes = [8, 64], strides = [1, 1]} : vector<8x256xf32> to vector<8x64xf32>
    %70 = vector.extract_strided_slice %65 {offsets = [0, 192], sizes = [8, 64], strides = [1, 1]} : vector<8x256xf32> to vector<8x64xf32>
    %71 = vector.extract_strided_slice %67 {offsets = [0, 0], sizes = [8, 64], strides = [1, 1]} : vector<8x128xf32> to vector<8x64xf32>
    %72 = arith.mulf %69, %54 : vector<8x64xf32>
    %73 = arith.mulf %68, %71 : vector<8x64xf32>
    %74 = arith.addf %72, %73 : vector<8x64xf32>
    %75 = math.tanh %74 : vector<8x64xf32>
    %76 = arith.mulf %70, %75 : vector<8x64xf32>
    %77 = vector.extract_strided_slice %14 {offsets = [24, 0], sizes = [8, 256], strides = [1, 1]} : vector<64x256xf32> to vector<8x256xf32>
    %78 = arith.truncf %76 : vector<8x64xf32> to vector<8x64xbf16>
    %cst_19 = arith.constant dense<0.000000e+00> : vector<8x256xf32>
    %79 = tpu.matmul %78, %2, %cst_19 {dimension_numbers = #tpu.dot_dimension_numbers<[1], [0], [0], [1], [0, 0, 1, 1], [], []>} : vector<8x64xbf16>, vector<64x256xbf16>, vector<8x256xf32> -> vector<8x256xf32>
    %80 = arith.addf %77, %79 : vector<8x256xf32>
    %81 = arith.negf %80 : vector<8x256xf32>
    %82 = math.exp %81 : vector<8x256xf32>
    %cst_20 = arith.constant 1.000000e+00 : f32
    %83 = vector.broadcast %cst_20 : f32 to vector<8x256xf32>
    %84 = arith.addf %83, %82 : vector<8x256xf32>
    %85 = arith.divf %83, %84 : vector<8x256xf32>
    %86 = vector.extract_strided_slice %80 {offsets = [0, 128], sizes = [8, 128], strides = [1, 1]} : vector<8x256xf32> to vector<8x128xf32>
    %87 = math.tanh %86 : vector<8x128xf32>
    %88 = vector.extract_strided_slice %85 {offsets = [0, 0], sizes = [8, 64], strides = [1, 1]} : vector<8x256xf32> to vector<8x64xf32>
    %89 = vector.extract_strided_slice %85 {offsets = [0, 64], sizes = [8, 64], strides = [1, 1]} : vector<8x256xf32> to vector<8x64xf32>
    %90 = vector.extract_strided_slice %85 {offsets = [0, 192], sizes = [8, 64], strides = [1, 1]} : vector<8x256xf32> to vector<8x64xf32>
    %91 = vector.extract_strided_slice %87 {offsets = [0, 0], sizes = [8, 64], strides = [1, 1]} : vector<8x128xf32> to vector<8x64xf32>
    %92 = arith.mulf %89, %74 : vector<8x64xf32>
    %93 = arith.mulf %88, %91 : vector<8x64xf32>
    %94 = arith.addf %92, %93 : vector<8x64xf32>
    %95 = math.tanh %94 : vector<8x64xf32>
    %96 = arith.mulf %90, %95 : vector<8x64xf32>
    %97 = vector.extract_strided_slice %14 {offsets = [32, 0], sizes = [8, 256], strides = [1, 1]} : vector<64x256xf32> to vector<8x256xf32>
    %98 = arith.truncf %96 : vector<8x64xf32> to vector<8x64xbf16>
    %cst_21 = arith.constant dense<0.000000e+00> : vector<8x256xf32>
    %99 = tpu.matmul %98, %2, %cst_21 {dimension_numbers = #tpu.dot_dimension_numbers<[1], [0], [0], [1], [0, 0, 1, 1], [], []>} : vector<8x64xbf16>, vector<64x256xbf16>, vector<8x256xf32> -> vector<8x256xf32>
    %100 = arith.addf %97, %99 : vector<8x256xf32>
    %101 = arith.negf %100 : vector<8x256xf32>
    %102 = math.exp %101 : vector<8x256xf32>
    %cst_22 = arith.constant 1.000000e+00 : f32
    %103 = vector.broadcast %cst_22 : f32 to vector<8x256xf32>
    %104 = arith.addf %103, %102 : vector<8x256xf32>
    %105 = arith.divf %103, %104 : vector<8x256xf32>
    %106 = vector.extract_strided_slice %100 {offsets = [0, 128], sizes = [8, 128], strides = [1, 1]} : vector<8x256xf32> to vector<8x128xf32>
    %107 = math.tanh %106 : vector<8x128xf32>
    %108 = vector.extract_strided_slice %105 {offsets = [0, 0], sizes = [8, 64], strides = [1, 1]} : vector<8x256xf32> to vector<8x64xf32>
    %109 = vector.extract_strided_slice %105 {offsets = [0, 64], sizes = [8, 64], strides = [1, 1]} : vector<8x256xf32> to vector<8x64xf32>
    %110 = vector.extract_strided_slice %105 {offsets = [0, 192], sizes = [8, 64], strides = [1, 1]} : vector<8x256xf32> to vector<8x64xf32>
    %111 = vector.extract_strided_slice %107 {offsets = [0, 0], sizes = [8, 64], strides = [1, 1]} : vector<8x128xf32> to vector<8x64xf32>
    %112 = arith.mulf %109, %94 : vector<8x64xf32>
    %113 = arith.mulf %108, %111 : vector<8x64xf32>
    %114 = arith.addf %112, %113 : vector<8x64xf32>
    %115 = math.tanh %114 : vector<8x64xf32>
    %116 = arith.mulf %110, %115 : vector<8x64xf32>
    %117 = vector.extract_strided_slice %14 {offsets = [40, 0], sizes = [8, 256], strides = [1, 1]} : vector<64x256xf32> to vector<8x256xf32>
    %118 = arith.truncf %116 : vector<8x64xf32> to vector<8x64xbf16>
    %cst_23 = arith.constant dense<0.000000e+00> : vector<8x256xf32>
    %119 = tpu.matmul %118, %2, %cst_23 {dimension_numbers = #tpu.dot_dimension_numbers<[1], [0], [0], [1], [0, 0, 1, 1], [], []>} : vector<8x64xbf16>, vector<64x256xbf16>, vector<8x256xf32> -> vector<8x256xf32>
    %120 = arith.addf %117, %119 : vector<8x256xf32>
    %121 = arith.negf %120 : vector<8x256xf32>
    %122 = math.exp %121 : vector<8x256xf32>
    %cst_24 = arith.constant 1.000000e+00 : f32
    %123 = vector.broadcast %cst_24 : f32 to vector<8x256xf32>
    %124 = arith.addf %123, %122 : vector<8x256xf32>
    %125 = arith.divf %123, %124 : vector<8x256xf32>
    %126 = vector.extract_strided_slice %120 {offsets = [0, 128], sizes = [8, 128], strides = [1, 1]} : vector<8x256xf32> to vector<8x128xf32>
    %127 = math.tanh %126 : vector<8x128xf32>
    %128 = vector.extract_strided_slice %125 {offsets = [0, 0], sizes = [8, 64], strides = [1, 1]} : vector<8x256xf32> to vector<8x64xf32>
    %129 = vector.extract_strided_slice %125 {offsets = [0, 64], sizes = [8, 64], strides = [1, 1]} : vector<8x256xf32> to vector<8x64xf32>
    %130 = vector.extract_strided_slice %125 {offsets = [0, 192], sizes = [8, 64], strides = [1, 1]} : vector<8x256xf32> to vector<8x64xf32>
    %131 = vector.extract_strided_slice %127 {offsets = [0, 0], sizes = [8, 64], strides = [1, 1]} : vector<8x128xf32> to vector<8x64xf32>
    %132 = arith.mulf %129, %114 : vector<8x64xf32>
    %133 = arith.mulf %128, %131 : vector<8x64xf32>
    %134 = arith.addf %132, %133 : vector<8x64xf32>
    %135 = math.tanh %134 : vector<8x64xf32>
    %136 = arith.mulf %130, %135 : vector<8x64xf32>
    %137 = vector.extract_strided_slice %14 {offsets = [48, 0], sizes = [8, 256], strides = [1, 1]} : vector<64x256xf32> to vector<8x256xf32>
    %138 = arith.truncf %136 : vector<8x64xf32> to vector<8x64xbf16>
    %cst_25 = arith.constant dense<0.000000e+00> : vector<8x256xf32>
    %139 = tpu.matmul %138, %2, %cst_25 {dimension_numbers = #tpu.dot_dimension_numbers<[1], [0], [0], [1], [0, 0, 1, 1], [], []>} : vector<8x64xbf16>, vector<64x256xbf16>, vector<8x256xf32> -> vector<8x256xf32>
    %140 = arith.addf %137, %139 : vector<8x256xf32>
    %141 = arith.negf %140 : vector<8x256xf32>
    %142 = math.exp %141 : vector<8x256xf32>
    %cst_26 = arith.constant 1.000000e+00 : f32
    %143 = vector.broadcast %cst_26 : f32 to vector<8x256xf32>
    %144 = arith.addf %143, %142 : vector<8x256xf32>
    %145 = arith.divf %143, %144 : vector<8x256xf32>
    %146 = vector.extract_strided_slice %140 {offsets = [0, 128], sizes = [8, 128], strides = [1, 1]} : vector<8x256xf32> to vector<8x128xf32>
    %147 = math.tanh %146 : vector<8x128xf32>
    %148 = vector.extract_strided_slice %145 {offsets = [0, 0], sizes = [8, 64], strides = [1, 1]} : vector<8x256xf32> to vector<8x64xf32>
    %149 = vector.extract_strided_slice %145 {offsets = [0, 64], sizes = [8, 64], strides = [1, 1]} : vector<8x256xf32> to vector<8x64xf32>
    %150 = vector.extract_strided_slice %145 {offsets = [0, 192], sizes = [8, 64], strides = [1, 1]} : vector<8x256xf32> to vector<8x64xf32>
    %151 = vector.extract_strided_slice %147 {offsets = [0, 0], sizes = [8, 64], strides = [1, 1]} : vector<8x128xf32> to vector<8x64xf32>
    %152 = arith.mulf %149, %134 : vector<8x64xf32>
    %153 = arith.mulf %148, %151 : vector<8x64xf32>
    %154 = arith.addf %152, %153 : vector<8x64xf32>
    %155 = math.tanh %154 : vector<8x64xf32>
    %156 = arith.mulf %150, %155 : vector<8x64xf32>
    %157 = vector.extract_strided_slice %14 {offsets = [56, 0], sizes = [8, 256], strides = [1, 1]} : vector<64x256xf32> to vector<8x256xf32>
    %158 = arith.truncf %156 : vector<8x64xf32> to vector<8x64xbf16>
    %cst_27 = arith.constant dense<0.000000e+00> : vector<8x256xf32>
    %159 = tpu.matmul %158, %2, %cst_27 {dimension_numbers = #tpu.dot_dimension_numbers<[1], [0], [0], [1], [0, 0, 1, 1], [], []>} : vector<8x64xbf16>, vector<64x256xbf16>, vector<8x256xf32> -> vector<8x256xf32>
    %160 = arith.addf %157, %159 : vector<8x256xf32>
    %161 = arith.negf %160 : vector<8x256xf32>
    %162 = math.exp %161 : vector<8x256xf32>
    %cst_28 = arith.constant 1.000000e+00 : f32
    %163 = vector.broadcast %cst_28 : f32 to vector<8x256xf32>
    %164 = arith.addf %163, %162 : vector<8x256xf32>
    %165 = arith.divf %163, %164 : vector<8x256xf32>
    %166 = vector.extract_strided_slice %160 {offsets = [0, 128], sizes = [8, 128], strides = [1, 1]} : vector<8x256xf32> to vector<8x128xf32>
    %167 = math.tanh %166 : vector<8x128xf32>
    %168 = vector.extract_strided_slice %165 {offsets = [0, 0], sizes = [8, 64], strides = [1, 1]} : vector<8x256xf32> to vector<8x64xf32>
    %169 = vector.extract_strided_slice %165 {offsets = [0, 64], sizes = [8, 64], strides = [1, 1]} : vector<8x256xf32> to vector<8x64xf32>
    %170 = vector.extract_strided_slice %165 {offsets = [0, 192], sizes = [8, 64], strides = [1, 1]} : vector<8x256xf32> to vector<8x64xf32>
    %171 = vector.extract_strided_slice %167 {offsets = [0, 0], sizes = [8, 64], strides = [1, 1]} : vector<8x128xf32> to vector<8x64xf32>
    %172 = arith.mulf %169, %154 : vector<8x64xf32>
    %173 = arith.mulf %168, %171 : vector<8x64xf32>
    %174 = arith.addf %172, %173 : vector<8x64xf32>
    %175 = math.tanh %174 : vector<8x64xf32>
    %176 = arith.mulf %170, %175 : vector<8x64xf32>
    %cst_29 = arith.constant dense<0.000000e+00> : vector<8x32xf32>
    %177 = tpu.matmul %176, %4, %cst_29 {dimension_numbers = #tpu.dot_dimension_numbers<[1], [0], [0], [1], [0, 0, 1, 1], [], []>} : vector<8x64xf32>, vector<64x32xf32>, vector<8x32xf32> -> vector<8x32xf32>
    %178 = vector.broadcast %5 : vector<1x32xf32> to vector<8x32xf32>
    %179 = arith.addf %177, %178 : vector<8x32xf32>
    %cst_30 = arith.constant dense<0.000000e+00> : vector<8x16xf32>
    %180 = tpu.matmul %179, %6, %cst_30 {dimension_numbers = #tpu.dot_dimension_numbers<[1], [0], [0], [1], [0, 0, 1, 1], [], []>} : vector<8x32xf32>, vector<32x16xf32>, vector<8x16xf32> -> vector<8x16xf32>
    %181 = vector.broadcast %7 : vector<1x16xf32> to vector<8x16xf32>
    %182 = arith.addf %180, %181 : vector<8x16xf32>
    %cst_31 = arith.constant 0.000000e+00 : f32
    %183 = vector.broadcast %cst_31 : f32 to vector<8x16xf32>
    %184 = arith.truncf %182 : vector<8x16xf32> to vector<8x16xbf16>
    %cst_32 = arith.constant dense<0.000000e+00> : vector<8x64xf32>
    %185 = tpu.matmul %184, %9, %cst_32 {dimension_numbers = #tpu.dot_dimension_numbers<[1], [0], [0], [1], [0, 0, 1, 1], [], []>} : vector<8x16xbf16>, vector<16x64xbf16>, vector<8x64xf32> -> vector<8x64xf32>
    %186 = vector.broadcast %10 : vector<1x64xf32> to vector<8x64xf32>
    %187 = arith.addf %185, %186 : vector<8x64xf32>
    %188 = arith.negf %187 : vector<8x64xf32>
    %189 = math.exp %188 : vector<8x64xf32>
    %cst_33 = arith.constant 1.000000e+00 : f32
    %190 = vector.broadcast %cst_33 : f32 to vector<8x64xf32>
    %191 = arith.addf %190, %189 : vector<8x64xf32>
    %192 = arith.divf %190, %191 : vector<8x64xf32>
    %193 = vector.extract_strided_slice %187 {offsets = [0, 32], sizes = [8, 32], strides = [1, 1]} : vector<8x64xf32> to vector<8x32xf32>
    %194 = math.tanh %193 : vector<8x32xf32>
    %195 = vector.extract_strided_slice %192 {offsets = [0, 0], sizes = [8, 16], strides = [1, 1]} : vector<8x64xf32> to vector<8x16xf32>
    %196 = vector.extract_strided_slice %192 {offsets = [0, 16], sizes = [8, 16], strides = [1, 1]} : vector<8x64xf32> to vector<8x16xf32>
    %197 = vector.extract_strided_slice %192 {offsets = [0, 48], sizes = [8, 16], strides = [1, 1]} : vector<8x64xf32> to vector<8x16xf32>
    %198 = vector.extract_strided_slice %194 {offsets = [0, 0], sizes = [8, 16], strides = [1, 1]} : vector<8x32xf32> to vector<8x16xf32>
    %199 = arith.mulf %196, %183 : vector<8x16xf32>
    %200 = arith.mulf %195, %198 : vector<8x16xf32>
    %201 = arith.addf %199, %200 : vector<8x16xf32>
    %202 = math.tanh %201 : vector<8x16xf32>
    %203 = arith.mulf %197, %202 : vector<8x16xf32>
    %204 = arith.truncf %203 : vector<8x16xf32> to vector<8x16xbf16>
    %cst_34 = arith.constant dense<0.000000e+00> : vector<8x64xf32>
    %205 = tpu.matmul %204, %9, %cst_34 {dimension_numbers = #tpu.dot_dimension_numbers<[1], [0], [0], [1], [0, 0, 1, 1], [], []>} : vector<8x16xbf16>, vector<16x64xbf16>, vector<8x64xf32> -> vector<8x64xf32>
    %206 = vector.broadcast %10 : vector<1x64xf32> to vector<8x64xf32>
    %207 = arith.addf %205, %206 : vector<8x64xf32>
    %208 = arith.negf %207 : vector<8x64xf32>
    %209 = math.exp %208 : vector<8x64xf32>
    %cst_35 = arith.constant 1.000000e+00 : f32
    %210 = vector.broadcast %cst_35 : f32 to vector<8x64xf32>
    %211 = arith.addf %210, %209 : vector<8x64xf32>
    %212 = arith.divf %210, %211 : vector<8x64xf32>
    %213 = vector.extract_strided_slice %207 {offsets = [0, 32], sizes = [8, 32], strides = [1, 1]} : vector<8x64xf32> to vector<8x32xf32>
    %214 = math.tanh %213 : vector<8x32xf32>
    %215 = vector.extract_strided_slice %212 {offsets = [0, 0], sizes = [8, 16], strides = [1, 1]} : vector<8x64xf32> to vector<8x16xf32>
    %216 = vector.extract_strided_slice %212 {offsets = [0, 16], sizes = [8, 16], strides = [1, 1]} : vector<8x64xf32> to vector<8x16xf32>
    %217 = vector.extract_strided_slice %212 {offsets = [0, 48], sizes = [8, 16], strides = [1, 1]} : vector<8x64xf32> to vector<8x16xf32>
    %218 = vector.extract_strided_slice %214 {offsets = [0, 0], sizes = [8, 16], strides = [1, 1]} : vector<8x32xf32> to vector<8x16xf32>
    %219 = arith.mulf %216, %201 : vector<8x16xf32>
    %220 = arith.mulf %215, %218 : vector<8x16xf32>
    %221 = arith.addf %219, %220 : vector<8x16xf32>
    %222 = math.tanh %221 : vector<8x16xf32>
    %223 = arith.mulf %217, %222 : vector<8x16xf32>
    %224 = arith.truncf %223 : vector<8x16xf32> to vector<8x16xbf16>
    %cst_36 = arith.constant dense<0.000000e+00> : vector<8x64xf32>
    %225 = tpu.matmul %224, %9, %cst_36 {dimension_numbers = #tpu.dot_dimension_numbers<[1], [0], [0], [1], [0, 0, 1, 1], [], []>} : vector<8x16xbf16>, vector<16x64xbf16>, vector<8x64xf32> -> vector<8x64xf32>
    %226 = vector.broadcast %10 : vector<1x64xf32> to vector<8x64xf32>
    %227 = arith.addf %225, %226 : vector<8x64xf32>
    %228 = arith.negf %227 : vector<8x64xf32>
    %229 = math.exp %228 : vector<8x64xf32>
    %cst_37 = arith.constant 1.000000e+00 : f32
    %230 = vector.broadcast %cst_37 : f32 to vector<8x64xf32>
    %231 = arith.addf %230, %229 : vector<8x64xf32>
    %232 = arith.divf %230, %231 : vector<8x64xf32>
    %233 = vector.extract_strided_slice %227 {offsets = [0, 32], sizes = [8, 32], strides = [1, 1]} : vector<8x64xf32> to vector<8x32xf32>
    %234 = math.tanh %233 : vector<8x32xf32>
    %235 = vector.extract_strided_slice %232 {offsets = [0, 0], sizes = [8, 16], strides = [1, 1]} : vector<8x64xf32> to vector<8x16xf32>
    %236 = vector.extract_strided_slice %232 {offsets = [0, 16], sizes = [8, 16], strides = [1, 1]} : vector<8x64xf32> to vector<8x16xf32>
    %237 = vector.extract_strided_slice %232 {offsets = [0, 48], sizes = [8, 16], strides = [1, 1]} : vector<8x64xf32> to vector<8x16xf32>
    %238 = vector.extract_strided_slice %234 {offsets = [0, 0], sizes = [8, 16], strides = [1, 1]} : vector<8x32xf32> to vector<8x16xf32>
    %239 = arith.mulf %236, %221 : vector<8x16xf32>
    %240 = arith.mulf %235, %238 : vector<8x16xf32>
    %241 = arith.addf %239, %240 : vector<8x16xf32>
    %242 = math.tanh %241 : vector<8x16xf32>
    %243 = arith.mulf %237, %242 : vector<8x16xf32>
    %244 = arith.truncf %243 : vector<8x16xf32> to vector<8x16xbf16>
    %cst_38 = arith.constant dense<0.000000e+00> : vector<8x64xf32>
    %245 = tpu.matmul %244, %9, %cst_38 {dimension_numbers = #tpu.dot_dimension_numbers<[1], [0], [0], [1], [0, 0, 1, 1], [], []>} : vector<8x16xbf16>, vector<16x64xbf16>, vector<8x64xf32> -> vector<8x64xf32>
    %246 = vector.broadcast %10 : vector<1x64xf32> to vector<8x64xf32>
    %247 = arith.addf %245, %246 : vector<8x64xf32>
    %248 = arith.negf %247 : vector<8x64xf32>
    %249 = math.exp %248 : vector<8x64xf32>
    %cst_39 = arith.constant 1.000000e+00 : f32
    %250 = vector.broadcast %cst_39 : f32 to vector<8x64xf32>
    %251 = arith.addf %250, %249 : vector<8x64xf32>
    %252 = arith.divf %250, %251 : vector<8x64xf32>
    %253 = vector.extract_strided_slice %247 {offsets = [0, 32], sizes = [8, 32], strides = [1, 1]} : vector<8x64xf32> to vector<8x32xf32>
    %254 = math.tanh %253 : vector<8x32xf32>
    %255 = vector.extract_strided_slice %252 {offsets = [0, 0], sizes = [8, 16], strides = [1, 1]} : vector<8x64xf32> to vector<8x16xf32>
    %256 = vector.extract_strided_slice %252 {offsets = [0, 16], sizes = [8, 16], strides = [1, 1]} : vector<8x64xf32> to vector<8x16xf32>
    %257 = vector.extract_strided_slice %252 {offsets = [0, 48], sizes = [8, 16], strides = [1, 1]} : vector<8x64xf32> to vector<8x16xf32>
    %258 = vector.extract_strided_slice %254 {offsets = [0, 0], sizes = [8, 16], strides = [1, 1]} : vector<8x32xf32> to vector<8x16xf32>
    %259 = arith.mulf %256, %241 : vector<8x16xf32>
    %260 = arith.mulf %255, %258 : vector<8x16xf32>
    %261 = arith.addf %259, %260 : vector<8x16xf32>
    %262 = math.tanh %261 : vector<8x16xf32>
    %263 = arith.mulf %257, %262 : vector<8x16xf32>
    %264 = arith.truncf %263 : vector<8x16xf32> to vector<8x16xbf16>
    %cst_40 = arith.constant dense<0.000000e+00> : vector<8x64xf32>
    %265 = tpu.matmul %264, %9, %cst_40 {dimension_numbers = #tpu.dot_dimension_numbers<[1], [0], [0], [1], [0, 0, 1, 1], [], []>} : vector<8x16xbf16>, vector<16x64xbf16>, vector<8x64xf32> -> vector<8x64xf32>
    %266 = vector.broadcast %10 : vector<1x64xf32> to vector<8x64xf32>
    %267 = arith.addf %265, %266 : vector<8x64xf32>
    %268 = arith.negf %267 : vector<8x64xf32>
    %269 = math.exp %268 : vector<8x64xf32>
    %cst_41 = arith.constant 1.000000e+00 : f32
    %270 = vector.broadcast %cst_41 : f32 to vector<8x64xf32>
    %271 = arith.addf %270, %269 : vector<8x64xf32>
    %272 = arith.divf %270, %271 : vector<8x64xf32>
    %273 = vector.extract_strided_slice %267 {offsets = [0, 32], sizes = [8, 32], strides = [1, 1]} : vector<8x64xf32> to vector<8x32xf32>
    %274 = math.tanh %273 : vector<8x32xf32>
    %275 = vector.extract_strided_slice %272 {offsets = [0, 0], sizes = [8, 16], strides = [1, 1]} : vector<8x64xf32> to vector<8x16xf32>
    %276 = vector.extract_strided_slice %272 {offsets = [0, 16], sizes = [8, 16], strides = [1, 1]} : vector<8x64xf32> to vector<8x16xf32>
    %277 = vector.extract_strided_slice %272 {offsets = [0, 48], sizes = [8, 16], strides = [1, 1]} : vector<8x64xf32> to vector<8x16xf32>
    %278 = vector.extract_strided_slice %274 {offsets = [0, 0], sizes = [8, 16], strides = [1, 1]} : vector<8x32xf32> to vector<8x16xf32>
    %279 = arith.mulf %276, %261 : vector<8x16xf32>
    %280 = arith.mulf %275, %278 : vector<8x16xf32>
    %281 = arith.addf %279, %280 : vector<8x16xf32>
    %282 = math.tanh %281 : vector<8x16xf32>
    %283 = arith.mulf %277, %282 : vector<8x16xf32>
    %284 = arith.truncf %283 : vector<8x16xf32> to vector<8x16xbf16>
    %cst_42 = arith.constant dense<0.000000e+00> : vector<8x64xf32>
    %285 = tpu.matmul %284, %9, %cst_42 {dimension_numbers = #tpu.dot_dimension_numbers<[1], [0], [0], [1], [0, 0, 1, 1], [], []>} : vector<8x16xbf16>, vector<16x64xbf16>, vector<8x64xf32> -> vector<8x64xf32>
    %286 = vector.broadcast %10 : vector<1x64xf32> to vector<8x64xf32>
    %287 = arith.addf %285, %286 : vector<8x64xf32>
    %288 = arith.negf %287 : vector<8x64xf32>
    %289 = math.exp %288 : vector<8x64xf32>
    %cst_43 = arith.constant 1.000000e+00 : f32
    %290 = vector.broadcast %cst_43 : f32 to vector<8x64xf32>
    %291 = arith.addf %290, %289 : vector<8x64xf32>
    %292 = arith.divf %290, %291 : vector<8x64xf32>
    %293 = vector.extract_strided_slice %287 {offsets = [0, 32], sizes = [8, 32], strides = [1, 1]} : vector<8x64xf32> to vector<8x32xf32>
    %294 = math.tanh %293 : vector<8x32xf32>
    %295 = vector.extract_strided_slice %292 {offsets = [0, 0], sizes = [8, 16], strides = [1, 1]} : vector<8x64xf32> to vector<8x16xf32>
    %296 = vector.extract_strided_slice %292 {offsets = [0, 16], sizes = [8, 16], strides = [1, 1]} : vector<8x64xf32> to vector<8x16xf32>
    %297 = vector.extract_strided_slice %292 {offsets = [0, 48], sizes = [8, 16], strides = [1, 1]} : vector<8x64xf32> to vector<8x16xf32>
    %298 = vector.extract_strided_slice %294 {offsets = [0, 0], sizes = [8, 16], strides = [1, 1]} : vector<8x32xf32> to vector<8x16xf32>
    %299 = arith.mulf %296, %281 : vector<8x16xf32>
    %300 = arith.mulf %295, %298 : vector<8x16xf32>
    %301 = arith.addf %299, %300 : vector<8x16xf32>
    %302 = math.tanh %301 : vector<8x16xf32>
    %303 = arith.mulf %297, %302 : vector<8x16xf32>
    %304 = arith.truncf %303 : vector<8x16xf32> to vector<8x16xbf16>
    %cst_44 = arith.constant dense<0.000000e+00> : vector<8x64xf32>
    %305 = tpu.matmul %304, %9, %cst_44 {dimension_numbers = #tpu.dot_dimension_numbers<[1], [0], [0], [1], [0, 0, 1, 1], [], []>} : vector<8x16xbf16>, vector<16x64xbf16>, vector<8x64xf32> -> vector<8x64xf32>
    %306 = vector.broadcast %10 : vector<1x64xf32> to vector<8x64xf32>
    %307 = arith.addf %305, %306 : vector<8x64xf32>
    %308 = arith.negf %307 : vector<8x64xf32>
    %309 = math.exp %308 : vector<8x64xf32>
    %cst_45 = arith.constant 1.000000e+00 : f32
    %310 = vector.broadcast %cst_45 : f32 to vector<8x64xf32>
    %311 = arith.addf %310, %309 : vector<8x64xf32>
    %312 = arith.divf %310, %311 : vector<8x64xf32>
    %313 = vector.extract_strided_slice %307 {offsets = [0, 32], sizes = [8, 32], strides = [1, 1]} : vector<8x64xf32> to vector<8x32xf32>
    %314 = math.tanh %313 : vector<8x32xf32>
    %315 = vector.extract_strided_slice %312 {offsets = [0, 0], sizes = [8, 16], strides = [1, 1]} : vector<8x64xf32> to vector<8x16xf32>
    %316 = vector.extract_strided_slice %312 {offsets = [0, 16], sizes = [8, 16], strides = [1, 1]} : vector<8x64xf32> to vector<8x16xf32>
    %317 = vector.extract_strided_slice %312 {offsets = [0, 48], sizes = [8, 16], strides = [1, 1]} : vector<8x64xf32> to vector<8x16xf32>
    %318 = vector.extract_strided_slice %314 {offsets = [0, 0], sizes = [8, 16], strides = [1, 1]} : vector<8x32xf32> to vector<8x16xf32>
    %319 = arith.mulf %316, %301 : vector<8x16xf32>
    %320 = arith.mulf %315, %318 : vector<8x16xf32>
    %321 = arith.addf %319, %320 : vector<8x16xf32>
    %322 = math.tanh %321 : vector<8x16xf32>
    %323 = arith.mulf %317, %322 : vector<8x16xf32>
    %324 = arith.truncf %323 : vector<8x16xf32> to vector<8x16xbf16>
    %cst_46 = arith.constant dense<0.000000e+00> : vector<8x64xf32>
    %325 = tpu.matmul %324, %9, %cst_46 {dimension_numbers = #tpu.dot_dimension_numbers<[1], [0], [0], [1], [0, 0, 1, 1], [], []>} : vector<8x16xbf16>, vector<16x64xbf16>, vector<8x64xf32> -> vector<8x64xf32>
    %326 = vector.broadcast %10 : vector<1x64xf32> to vector<8x64xf32>
    %327 = arith.addf %325, %326 : vector<8x64xf32>
    %328 = arith.negf %327 : vector<8x64xf32>
    %329 = math.exp %328 : vector<8x64xf32>
    %cst_47 = arith.constant 1.000000e+00 : f32
    %330 = vector.broadcast %cst_47 : f32 to vector<8x64xf32>
    %331 = arith.addf %330, %329 : vector<8x64xf32>
    %332 = arith.divf %330, %331 : vector<8x64xf32>
    %333 = vector.extract_strided_slice %327 {offsets = [0, 32], sizes = [8, 32], strides = [1, 1]} : vector<8x64xf32> to vector<8x32xf32>
    %334 = math.tanh %333 : vector<8x32xf32>
    %335 = vector.extract_strided_slice %332 {offsets = [0, 0], sizes = [8, 16], strides = [1, 1]} : vector<8x64xf32> to vector<8x16xf32>
    %336 = vector.extract_strided_slice %332 {offsets = [0, 16], sizes = [8, 16], strides = [1, 1]} : vector<8x64xf32> to vector<8x16xf32>
    %337 = vector.extract_strided_slice %332 {offsets = [0, 48], sizes = [8, 16], strides = [1, 1]} : vector<8x64xf32> to vector<8x16xf32>
    %338 = vector.extract_strided_slice %334 {offsets = [0, 0], sizes = [8, 16], strides = [1, 1]} : vector<8x32xf32> to vector<8x16xf32>
    %339 = arith.mulf %336, %321 : vector<8x16xf32>
    %340 = arith.mulf %335, %338 : vector<8x16xf32>
    %341 = arith.addf %339, %340 : vector<8x16xf32>
    %342 = math.tanh %341 : vector<8x16xf32>
    %343 = arith.mulf %337, %342 : vector<8x16xf32>
    %344 = tpu.concatenate %203, %223, %243, %263, %283, %303, %323, %343 in 1 : vector<8x16xf32>, vector<8x16xf32>, vector<8x16xf32>, vector<8x16xf32>, vector<8x16xf32>, vector<8x16xf32>, vector<8x16xf32>, vector<8x16xf32> -> vector<8x128xf32>
    %c0_48 = arith.constant 0 : index
    %c0_49 = arith.constant 0 : index
    %345 = vector.load %arg2[%c0_48, %c0_49] : memref<8x128xf32, #tpu.memory_space<vmem>>, vector<8x128xf32>
    tpu.vector_store %arg2[%c0_48, %c0_49], %344 {strides = array<i32>} : memref<8x128xf32, #tpu.memory_space<vmem>>, vector<8x128xf32>,
    return
  }
}

</mosaic_0001>

<llo_original>
// kernel: forward.1
$region0: #{forward.1}
  #allocation0 [shape = 'u32[]', space=smem, size = 0x4, offset = 0x4, fixed_abs, tag = 'smem constant byte address 0x4 - core index']
  #allocation1 [shape = 'u32[72,128]{1,0:T(1,128)}', space=vmem, size = 0x9000, scoped, tag = 'internal scratch']
  %s0 = inlined_call_operand.vmem [shape: f32[64,16], index: 0, kind: input, shape index: {}]
  %s1 = inlined_call_operand.hbm [shape: f32[224,256], index: 1, kind: input, shape index: {}]
  %s2 = inlined_call_operand.vmem [shape: f32[8,128], index: 2, kind: output, shape index: {}]
  %s3 = sld [smem:[#allocation0]]
  $region22: #{forward.1} parent=0
    _
  %s5 = ssub.s32 1, %s3
  %s6 = scalar_select 0, %s5, %s3
  $region1: #{forward.1} parent=0
    #allocation2 [shape = 'u8[229376]{0}', space=vmem, size = 0x38000, scoped, tag = 'input window, operand 1, single buffered']
    #allocation3 [shape = 's32[1]{0}', space=sflag, size = 0x4, scoped, tag = 'scoped memory for forward.1']
    %7 = vsyncpa [#allocation3], 0
    // Predicated region
    $region2: #{forward.1} parent=1 // pred_check
      _
    $region3: #{forward.1} parent=1 // pred_check_branch
      %9 = sbr.rel (0) target = $region5
    $region4: #{forward.1} parent=1 // pred_region
      _
    $region5: #{forward.1} parent=1 // pred_fallthru
      _
    // Predicated region
    $region6: #{forward.1} parent=1 // pred_check
      _
    $region7: #{forward.1} parent=1 // pred_check_branch
      %11 = sbr.rel (0) target = $region9
    $region8: #{forward.1} parent=1 // pred_region
      %13 = vsyncadd [#allocation3], 0
      %s14 = sshll.u32 %s1, 4
      %s15 = int_to_ptr.hbm [resolvable:$true] %s14
      %s16 = sshll.u32 [#allocation2], 4
      %s17 = int_to_ptr.vmem [resolvable:$true] %s16
      %22 = dma.hbm_to_vmem [thread:$0]  %s15, 7168, %s17, [#allocation3], 256, 256, 16
    $region9: #{forward.1} parent=1 // pred_fallthru
      _
    // Predicated region
    $region10: #{forward.1} parent=1 // pred_check
      _
    $region11: #{forward.1} parent=1 // pred_check_branch
      %24 = sbr.rel (0) target = $region13
    $region12: #{forward.1} parent=1 // pred_region
      %26 = dma.done [#allocation3], 7168
    $region13: #{forward.1} parent=1 // pred_fallthru
      _
    %v28 = vld [vmem:[#allocation2] sm:$0xff]
    %v29 = vld [vmem:[#allocation2 + $0x8] sm:$0xff]
    %v30 = vld [vmem:[#allocation2 + $0x10] sm:$0xff]
    %v31 = vld [vmem:[#allocation2 + $0x18] sm:$0xff]
    %v32 = vld [vmem:[#allocation2 + $0x20] sm:$0xff]
    %v33 = vld [vmem:[#allocation2 + $0x28] sm:$0xff]
    %v34 = vld [vmem:[#allocation2 + $0x30] sm:$0xff]
    %v35 = vld [vmem:[#allocation2 + $0x38] sm:$0xff]
    %v36 = vld [vmem:[#allocation2 + $0x40] sm:$0xff]
    %v37 = vld [vmem:[#allocation2 + $0x48] sm:$0xff]
    %v38 = vld [vmem:[#allocation2 + $0x50] sm:$0xff]
    %v39 = vld [vmem:[#allocation2 + $0x58] sm:$0xff]
    %v40 = vld [vmem:[#allocation2 + $0x60] sm:$0xff]
    %v41 = vld [vmem:[#allocation2 + $0x68] sm:$0xff]
    %v42 = vld [vmem:[#allocation2 + $0x70] sm:$0xff]
    %v43 = vld [vmem:[#allocation2 + $0x78] sm:$0xff]
    %v44 = vld [vmem:[#allocation2 + $0x80] sm:$0xff]
    %v45 = vld [vmem:[#allocation2 + $0x88] sm:$0xff]
    %v46 = vld [vmem:[#allocation2 + $0x90] sm:$0xff]
    %v47 = vld [vmem:[#allocation2 + $0x98] sm:$0xff]
    %v48 = vpack.c.bf16 %v34, %v32
    %v49 = vpack.c.bf16 %v35, %v33
    %v50 = vpack.c.bf16 %v38, %v36
    %v51 = vpack.c.bf16 %v39, %v37
    %v52 = vpack.c.bf16 %v42, %v40
    %v53 = vpack.c.bf16 %v43, %v41
    %v54 = vpack.c.bf16 %v46, %v44
    %v55 = vpack.c.bf16 %v47, %v45
    %s56 = scalar_lea.vmem [#allocation2], 160
    %v57 = vld [vmem:[%s56] ss:$8 sm:$0x3]
    %v58 = vld [vmem:[#allocation2 + $0xb0] sm:$0xff]
    %v59 = vld [vmem:[#allocation2 + $0xc0] sm:$0xff]
    %v60 = vld [vmem:[#allocation2 + $0xd0] sm:$0xff]
    %v61 = vld [vmem:[#allocation2 + $0xe0] sm:$0xff]
    %v62 = vld [vmem:[#allocation2 + $0xf0] sm:$0xff]
    %v63 = vld [vmem:[#allocation2 + $0x100] sm:$0xff]
    %v64 = vld [vmem:[#allocation2 + $0x110] sm:$0xff]
    %v65 = vld [vmem:[#allocation2 + $0x120] sm:$0xff]
    %v66 = vld [vmem:[#allocation2 + $0x130] ss:$0 sm:$0xff]
    %v67 = vld [vmem:[#allocation2 + $0x140] sm:$0xff]
    %v68 = vld [vmem:[#allocation2 + $0x150] sm:$0xff]
    %v69 = vld [vmem:[#allocation2 + $0x160] sm:$0xff]
    %v70 = vld [vmem:[#allocation2 + $0x170] sm:$0xff]
    %v71 = vld [vmem:[#allocation2 + $0x180] ss:$0 sm:$0xff]
    %v72 = vld [vmem:[#allocation2 + $0x190] sm:$0xff]
    %v73 = vld [vmem:[#allocation2 + $0x1a0] sm:$0xff]
    %v74 = vpack.c.bf16 %v73, %v72
    %v75 = vld [vmem:[#allocation2 + $0x1b0] ss:$0 sm:$0xff]
    %v76 = vld [vmem:[%s0] sm:$0xff]
    %v77 = vld [vmem:[%s0 + $0x8] sm:$0xff]
    %v78 = vld [vmem:[%s0 + $0x10] sm:$0xff]
    %v79 = vld [vmem:[%s0 + $0x18] sm:$0xff]
    %v80 = vld [vmem:[%s0 + $0x20] sm:$0xff]
    %v81 = vld [vmem:[%s0 + $0x28] sm:$0xff]
    %v82 = vld [vmem:[%s0 + $0x30] sm:$0xff]
    %v83 = vld [vmem:[%s0 + $0x38] sm:$0xff]
    %v85 = vperm.slane %v57, 0
    %v86 = vperm.slane %v57, 1
    %vm89 = vcmask 130048
    %v91 = vsel %vm89, %v76, 0
    %v94 = vsel %vm89, %v77, 0
    %v97 = vsel %vm89, %v78, 0
    %v100 = vsel %vm89, %v79, 0
    %v103 = vsel %vm89, %v80, 0
    %v106 = vsel %vm89, %v81, 0
    %v109 = vsel %vm89, %v82, 0
    %v112 = vsel %vm89, %v83, 0
    %114 = vmatpush.msra.mxu0 0.0
    %115 = vmatpush.msra.mxu0 0.0
    %116 = vmatpush.msra.mxu0 0.0
    %117 = vmatpush.msra.mxu0 0.0
    %118 = vmatpush.msra.mxu0 0.0
    %119 = vmatpush.msra.mxu0 0.0
    %120 = vmatpush.msra.mxu0 0.0
    %121 = vmatpush.msra.mxu0 0.0
    %122 = vmatpush.msra.mxu0 0.0
    %123 = vmatpush.msra.mxu0 0.0
    %124 = vmatpush.msra.mxu0 0.0
    %125 = vmatpush.msra.mxu0 0.0
    %126 = vmatpush.msra.mxu0 0.0
    %127 = vmatpush.msra.mxu0 0.0
    %128 = vmatpush.msra.mxu0 %v30
    %129 = vmatpush.msra.mxu0 %v28
    %130 = vmatmul.f32.gmra.mxu0 %v91
    %v131 = vpop.f32.mrf.mxu0
    %v132 = vadd.f32 %v85, %v131
    %133 = vmatmul.f32.gmra.mxu0 %v94
    %v134 = vpop.f32.mrf.mxu0
    %v135 = vadd.f32 %v85, %v134
    %136 = vmatmul.f32.gmra.mxu0 %v97
    %v137 = vpop.f32.mrf.mxu0
    %v138 = vadd.f32 %v85, %v137
    %139 = vmatmul.f32.gmra.mxu0 %v100
    %v140 = vpop.f32.mrf.mxu0
    %v141 = vadd.f32 %v85, %v140
    %142 = vmatmul.f32.gmra.mxu0 %v103
    %v143 = vpop.f32.mrf.mxu0
    %v144 = vadd.f32 %v85, %v143
    %145 = vmatmul.f32.gmra.mxu0 %v106
    %v146 = vpop.f32.mrf.mxu0
    %v147 = vadd.f32 %v85, %v146
    %148 = vmatmul.f32.gmra.mxu0 %v109
    %v149 = vpop.f32.mrf.mxu0
    %v150 = vadd.f32 %v85, %v149
    %151 = vmatmul.f32.gmra.mxu0 %v112
    %v152 = vpop.f32.mrf.mxu0
    %v153 = vadd.f32 %v85, %v152
    %154 = vdwg.mxu0
    %155 = vmatpush.msra.mxu0 0.0
    %156 = vmatpush.msra.mxu0 0.0
    %157 = vmatpush.msra.mxu0 0.0
    %158 = vmatpush.msra.mxu0 0.0
    %159 = vmatpush.msra.mxu0 0.0
    %160 = vmatpush.msra.mxu0 0.0
    %161 = vmatpush.msra.mxu0 0.0
    %162 = vmatpush.msra.mxu0 0.0
    %163 = vmatpush.msra.mxu0 0.0
    %164 = vmatpush.msra.mxu0 0.0
    %165 = vmatpush.msra.mxu0 0.0
    %166 = vmatpush.msra.mxu0 0.0
    %167 = vmatpush.msra.mxu0 0.0
    %168 = vmatpush.msra.mxu0 0.0
    %169 = vmatpush.msra.mxu0 %v31
    %170 = vmatpush.msra.mxu0 %v29
    %171 = vmatmul.f32.gmra.mxu0 %v91
    %v172 = vpop.f32.mrf.mxu0
    %v173 = vadd.f32 %v86, %v172
    %174 = vmatmul.f32.gmra.mxu0 %v94
    %v175 = vpop.f32.mrf.mxu0
    %v176 = vadd.f32 %v86, %v175
    %177 = vmatmul.f32.gmra.mxu0 %v97
    %v178 = vpop.f32.mrf.mxu0
    %v179 = vadd.f32 %v86, %v178
    %180 = vmatmul.f32.gmra.mxu0 %v100
    %v181 = vpop.f32.mrf.mxu0
    %v182 = vadd.f32 %v86, %v181
    %183 = vmatmul.f32.gmra.mxu0 %v103
    %v184 = vpop.f32.mrf.mxu0
    %v185 = vadd.f32 %v86, %v184
    %186 = vmatmul.f32.gmra.mxu0 %v106
    %v187 = vpop.f32.mrf.mxu0
    %v188 = vadd.f32 %v86, %v187
    %189 = vmatmul.f32.gmra.mxu0 %v109
    %v190 = vpop.f32.mrf.mxu0
    %v191 = vadd.f32 %v86, %v190
    %192 = vmatmul.f32.gmra.mxu0 %v112
    %v193 = vpop.f32.mrf.mxu0
    %v194 = vadd.f32 %v86, %v193
    %195 = vdwg.mxu0
    %vm196 = vcmask 523264
    %v198 = vsel %vm196, 0, 0
    %200 = vmatpush.bf16.msra.mxu0 0
    %201 = vmatpush.bf16.msra.mxu0 0
    %202 = vmatpush.bf16.msra.mxu0 0
    %203 = vmatpush.bf16.msra.mxu0 0
    %204 = vmatpush.bf16.msra.mxu0 %v54
    %205 = vmatpush.bf16.msra.mxu0 %v52
    %206 = vmatpush.bf16.msra.mxu0 %v50
    %207 = vmatpush.bf16.msra.mxu0 %v48
    %208 = vmatmul.bf16.gmra.mxu0 %v198
    %v209 = vpop.f32.mrf.mxu0
    %v210 = vadd.f32 0.0, %v209
    %v211 = vpop.f32.mrf.mxu0
    %212 = vdwg.mxu0
    %213 = vmatpush.bf16.msra.mxu0 0
    %214 = vmatpush.bf16.msra.mxu0 0
    %215 = vmatpush.bf16.msra.mxu0 0
    %216 = vmatpush.bf16.msra.mxu0 0
    %217 = vmatpush.bf16.msra.mxu0 %v55
    %218 = vmatpush.bf16.msra.mxu0 %v53
    %219 = vmatpush.bf16.msra.mxu0 %v51
    %220 = vmatpush.bf16.msra.mxu0 %v49
    %221 = vmatmul.bf16.gmra.mxu0 %v198
    %v222 = vpop.f32.mrf.mxu0
    %v223 = vadd.f32 0.0, %v222
    %v224 = vpop.f32.mrf.mxu0
    %225 = vdwg.mxu0
    %v226 = vadd.f32 %v132, %v210
    %v227 = vadd.f32 %v173, %v223
    %v228 = vxor.u32 %v226, 2147483648
    %v229 = vxor.u32 %v227, 2147483648
    %v230 = vmul.f32 %v228, 1.442695
    %v231 = vpow.pop %v230
    %v232 = vmul.f32 %v229, 1.442695
    %v233 = vpow.pop %v232
    %v234 = vadd.f32 %v231, 1.0
    %v235 = vadd.f32 %v233, 1.0
    %v236 = vrcp.pop %v234
    %v237 = vmul.f32 %v234, %v236
    %v238 = vsub.f32 1.0, %v237
    %v239 = vmul.f32 %v236, %v238
    %v240 = vadd.f32 %v236, %v239
    %vm241 = vweird.f32 %v234
    %vm242 = vweird.f32 %v236
    %vm243 = vmor %vm241, %vm242
    %v244 = vsel %vm243, %v236, %v240
    %v245 = vand.u32 2147483647, %v234
    %vm246 = vcmp.eq.f32.partialorder %v245, 8.507059e+37
    %v247 = vand.u32 %v234, 2147483648
    %v248 = vor.u32 1.1754944e-38, %v247
    %v249 = vsel %vm246, %v248, %v244
    %v250 = vmul.f32 1.0, %v249
    %v251 = vrcp.pop %v235
    %v252 = vmul.f32 %v235, %v251
    %v253 = vsub.f32 1.0, %v252
    %v254 = vmul.f32 %v251, %v253
    %v255 = vadd.f32 %v251, %v254
    %vm256 = vweird.f32 %v235
    %vm257 = vweird.f32 %v251
    %vm258 = vmor %vm256, %vm257
    %v259 = vsel %vm258, %v251, %v255
    %v260 = vand.u32 2147483647, %v235
    %vm261 = vcmp.eq.f32.partialorder %v260, 8.507059e+37
    %v262 = vand.u32 %v235, 2147483648
    %v263 = vor.u32 1.1754944e-38, %v262
    %v264 = vsel %vm261, %v263, %v259
    %v265 = vmul.f32 1.0, %v264
    %v266 = vtanh.pop %v227
    %v267 = vmul.f32 %v250, 0.0
    %v268 = vmul.f32 %v250, %v266
    %270 = vrot.lane.b32.xlu0 %v268, 64
    %v271 = vpop.permute.xlu0 %270
    %v273 = vadd.f32 %v267, %v271
    %v274 = vtanh.pop %v273
    %v275 = vmul.f32 %v265, %v274
    %v276 = vpack.c.bf16 %v275, %v275
    %278 = vrot.lane.b32.xlu0 %v276, 64
    %v279 = vpop.permute.xlu0 %278
    %v281 = vsel %vm196, %v279, 0
    %283 = vmatpush.bf16.msra.mxu0 0
    %284 = vmatpush.bf16.msra.mxu0 0
    %285 = vmatpush.bf16.msra.mxu0 0
    %286 = vmatpush.bf16.msra.mxu0 0
    %287 = vmatpush.bf16.msra.mxu0 %v54
    %288 = vmatpush.bf16.msra.mxu0 %v52
    %289 = vmatpush.bf16.msra.mxu0 %v50
    %290 = vmatpush.bf16.msra.mxu0 %v48
    %291 = vmatmul.bf16.gmra.mxu0 %v281
    %v292 = vpop.f32.mrf.mxu0
    %v293 = vadd.f32 0.0, %v292
    %v294 = vpop.f32.mrf.mxu0
    %295 = vdwg.mxu0
    %296 = vmatpush.bf16.msra.mxu0 0
    %297 = vmatpush.bf16.msra.mxu0 0
    %298 = vmatpush.bf16.msra.mxu0 0
    %299 = vmatpush.bf16.msra.mxu0 0
    %300 = vmatpush.bf16.msra.mxu0 %v55
    %301 = vmatpush.bf16.msra.mxu0 %v53
    %302 = vmatpush.bf16.msra.mxu0 %v51
    %303 = vmatpush.bf16.msra.mxu0 %v49
    %304 = vmatmul.bf16.gmra.mxu0 %v281
    %v305 = vpop.f32.mrf.mxu0
    %v306 = vadd.f32 0.0, %v305
    %v307 = vpop.f32.mrf.mxu0
    %308 = vdwg.mxu0
    %v309 = vadd.f32 %v135, %v293
    %v310 = vadd.f32 %v176, %v306
    %v311 = vxor.u32 %v309, 2147483648
    %v312 = vxor.u32 %v310, 2147483648
    %v313 = vmul.f32 %v311, 1.442695
    %v314 = vpow.pop %v313
    %v315 = vmul.f32 %v312, 1.442695
    %v316 = vpow.pop %v315
    %v317 = vadd.f32 %v314, 1.0
    %v318 = vadd.f32 %v316, 1.0
    %v319 = vrcp.pop %v317
    %v320 = vmul.f32 %v317, %v319
    %v321 = vsub.f32 1.0, %v320
    %v322 = vmul.f32 %v319, %v321
    %v323 = vadd.f32 %v319, %v322
    %vm324 = vweird.f32 %v317
    %vm325 = vweird.f32 %v319
    %vm326 = vmor %vm324, %vm325
    %v327 = vsel %vm326, %v319, %v323
    %v328 = vand.u32 2147483647, %v317
    %vm329 = vcmp.eq.f32.partialorder %v328, 8.507059e+37
    %v330 = vand.u32 %v317, 2147483648
    %v331 = vor.u32 1.1754944e-38, %v330
    %v332 = vsel %vm329, %v331, %v327
    %v333 = vmul.f32 1.0, %v332
    %v334 = vrcp.pop %v318
    %v335 = vmul.f32 %v318, %v334
    %v336 = vsub.f32 1.0, %v335
    %v337 = vmul.f32 %v334, %v336
    %v338 = vadd.f32 %v334, %v337
    %vm339 = vweird.f32 %v318
    %vm340 = vweird.f32 %v334
    %vm341 = vmor %vm339, %vm340
    %v342 = vsel %vm341, %v334, %v338
    %v343 = vand.u32 2147483647, %v318
    %vm344 = vcmp.eq.f32.partialorder %v343, 8.507059e+37
    %v345 = vand.u32 %v318, 2147483648
    %v346 = vor.u32 1.1754944e-38, %v345
    %v347 = vsel %vm344, %v346, %v342
    %v348 = vmul.f32 1.0, %v347
    %v349 = vtanh.pop %v310
    %v350 = vmul.f32 %v333, %v273
    %v351 = vmul.f32 %v333, %v349
    %353 = vrot.lane.b32.xlu0 %v351, 64
    %v354 = vpop.permute.xlu0 %353
    %v356 = vadd.f32 %v350, %v354
    %v357 = vtanh.pop %v356
    %v358 = vmul.f32 %v348, %v357
    %v359 = vpack.c.bf16 %v358, %v358
    %361 = vrot.lane.b32.xlu0 %v359, 64
    %v362 = vpop.permute.xlu0 %361
    %v364 = vsel %vm196, %v362, 0
    %366 = vmatpush.bf16.msra.mxu0 0
    %367 = vmatpush.bf16.msra.mxu0 0
    %368 = vmatpush.bf16.msra.mxu0 0
    %369 = vmatpush.bf16.msra.mxu0 0
    %370 = vmatpush.bf16.msra.mxu0 %v54
    %371 = vmatpush.bf16.msra.mxu0 %v52
    %372 = vmatpush.bf16.msra.mxu0 %v50
    %373 = vmatpush.bf16.msra.mxu0 %v48
    %374 = vmatmul.bf16.gmra.mxu0 %v364
    %v375 = vpop.f32.mrf.mxu0
    %v376 = vadd.f32 0.0, %v375
    %v377 = vpop.f32.mrf.mxu0
    %378 = vdwg.mxu0
    %379 = vmatpush.bf16.msra.mxu0 0
    %380 = vmatpush.bf16.msra.mxu0 0
    %381 = vmatpush.bf16.msra.mxu0 0
    %382 = vmatpush.bf16.msra.mxu0 0
    %383 = vmatpush.bf16.msra.mxu0 %v55
    %384 = vmatpush.bf16.msra.mxu0 %v53
    %385 = vmatpush.bf16.msra.mxu0 %v51
    %386 = vmatpush.bf16.msra.mxu0 %v49
    %387 = vmatmul.bf16.gmra.mxu0 %v364
    %v388 = vpop.f32.mrf.mxu0
    %v389 = vadd.f32 0.0, %v388
    %v390 = vpop.f32.mrf.mxu0
    %391 = vdwg.mxu0
    %v392 = vadd.f32 %v138, %v376
    %v393 = vadd.f32 %v179, %v389
    %v394 = vxor.u32 %v392, 2147483648
    %v395 = vxor.u32 %v393, 2147483648
    %v396 = vmul.f32 %v394, 1.442695
    %v397 = vpow.pop %v396
    %v398 = vmul.f32 %v395, 1.442695
    %v399 = vpow.pop %v398
    %v400 = vadd.f32 %v397, 1.0
    %v401 = vadd.f32 %v399, 1.0
    %v402 = vrcp.pop %v400
    %v403 = vmul.f32 %v400, %v402
    %v404 = vsub.f32 1.0, %v403
    %v405 = vmul.f32 %v402, %v404
    %v406 = vadd.f32 %v402, %v405
    %vm407 = vweird.f32 %v400
    %vm408 = vweird.f32 %v402
    %vm409 = vmor %vm407, %vm408
    %v410 = vsel %vm409, %v402, %v406
    %v411 = vand.u32 2147483647, %v400
    %vm412 = vcmp.eq.f32.partialorder %v411, 8.507059e+37
    %v413 = vand.u32 %v400, 2147483648
    %v414 = vor.u32 1.1754944e-38, %v413
    %v415 = vsel %vm412, %v414, %v410
    %v416 = vmul.f32 1.0, %v415
    %v417 = vrcp.pop %v401
    %v418 = vmul.f32 %v401, %v417
    %v419 = vsub.f32 1.0, %v418
    %v420 = vmul.f32 %v417, %v419
    %v421 = vadd.f32 %v417, %v420
    %vm422 = vweird.f32 %v401
    %vm423 = vweird.f32 %v417
    %vm424 = vmor %vm422, %vm423
    %v425 = vsel %vm424, %v417, %v421
    %v426 = vand.u32 2147483647, %v401
    %vm427 = vcmp.eq.f32.partialorder %v426, 8.507059e+37
    %v428 = vand.u32 %v401, 2147483648
    %v429 = vor.u32 1.1754944e-38, %v428
    %v430 = vsel %vm427, %v429, %v425
    %v431 = vmul.f32 1.0, %v430
    %v432 = vtanh.pop %v393
    %v433 = vmul.f32 %v416, %v356
    %v434 = vmul.f32 %v416, %v432
    %436 = vrot.lane.b32.xlu0 %v434, 64
    %v437 = vpop.permute.xlu0 %436
    %v439 = vadd.f32 %v433, %v437
    %v440 = vtanh.pop %v439
    %v441 = vmul.f32 %v431, %v440
    %v442 = vpack.c.bf16 %v441, %v441
    %444 = vrot.lane.b32.xlu0 %v442, 64
    %v445 = vpop.permute.xlu0 %444
    %v447 = vsel %vm196, %v445, 0
    %449 = vmatpush.bf16.msra.mxu0 0
    %450 = vmatpush.bf16.msra.mxu0 0
    %451 = vmatpush.bf16.msra.mxu0 0
    %452 = vmatpush.bf16.msra.mxu0 0
    %453 = vmatpush.bf16.msra.mxu0 %v54
    %454 = vmatpush.bf16.msra.mxu0 %v52
    %455 = vmatpush.bf16.msra.mxu0 %v50
    %456 = vmatpush.bf16.msra.mxu0 %v48
    %457 = vmatmul.bf16.gmra.mxu0 %v447
    %v458 = vpop.f32.mrf.mxu0
    %v459 = vadd.f32 0.0, %v458
    %v460 = vpop.f32.mrf.mxu0
    %461 = vdwg.mxu0
    %462 = vmatpush.bf16.msra.mxu0 0
    %463 = vmatpush.bf16.msra.mxu0 0
    %464 = vmatpush.bf16.msra.mxu0 0
    %465 = vmatpush.bf16.msra.mxu0 0
    %466 = vmatpush.bf16.msra.mxu0 %v55
    %467 = vmatpush.bf16.msra.mxu0 %v53
    %468 = vmatpush.bf16.msra.mxu0 %v51
    %469 = vmatpush.bf16.msra.mxu0 %v49
    %470 = vmatmul.bf16.gmra.mxu0 %v447
    %v471 = vpop.f32.mrf.mxu0
    %v472 = vadd.f32 0.0, %v471
    %v473 = vpop.f32.mrf.mxu0
    %474 = vdwg.mxu0
    %v475 = vadd.f32 %v141, %v459
    %v476 = vadd.f32 %v182, %v472
    %v477 = vxor.u32 %v475, 2147483648
    %v478 = vxor.u32 %v476, 2147483648
    %v479 = vmul.f32 %v477, 1.442695
    %v480 = vpow.pop %v479
    %v481 = vmul.f32 %v478, 1.442695
    %v482 = vpow.pop %v481
    %v483 = vadd.f32 %v480, 1.0
    %v484 = vadd.f32 %v482, 1.0
    %v485 = vrcp.pop %v483
    %v486 = vmul.f32 %v483, %v485
    %v487 = vsub.f32 1.0, %v486
    %v488 = vmul.f32 %v485, %v487
    %v489 = vadd.f32 %v485, %v488
    %vm490 = vweird.f32 %v483
    %vm491 = vweird.f32 %v485
    %vm492 = vmor %vm490, %vm491
    %v493 = vsel %vm492, %v485, %v489
    %v494 = vand.u32 2147483647, %v483
    %vm495 = vcmp.eq.f32.partialorder %v494, 8.507059e+37
    %v496 = vand.u32 %v483, 2147483648
    %v497 = vor.u32 1.1754944e-38, %v496
    %v498 = vsel %vm495, %v497, %v493
    %v499 = vmul.f32 1.0, %v498
    %v500 = vrcp.pop %v484
    %v501 = vmul.f32 %v484, %v500
    %v502 = vsub.f32 1.0, %v501
    %v503 = vmul.f32 %v500, %v502
    %v504 = vadd.f32 %v500, %v503
    %vm505 = vweird.f32 %v484
    %vm506 = vweird.f32 %v500
    %vm507 = vmor %vm505, %vm506
    %v508 = vsel %vm507, %v500, %v504
    %v509 = vand.u32 2147483647, %v484
    %vm510 = vcmp.eq.f32.partialorder %v509, 8.507059e+37
    %v511 = vand.u32 %v484, 2147483648
    %v512 = vor.u32 1.1754944e-38, %v511
    %v513 = vsel %vm510, %v512, %v508
    %v514 = vmul.f32 1.0, %v513
    %v515 = vtanh.pop %v476
    %v516 = vmul.f32 %v499, %v439
    %v517 = vmul.f32 %v499, %v515
    %519 = vrot.lane.b32.xlu0 %v517, 64
    %v520 = vpop.permute.xlu0 %519
    %v522 = vadd.f32 %v516, %v520
    %v523 = vtanh.pop %v522
    %v524 = vmul.f32 %v514, %v523
    %v525 = vpack.c.bf16 %v524, %v524
    %527 = vrot.lane.b32.xlu0 %v525, 64
    %v528 = vpop.permute.xlu0 %527
    %v530 = vsel %vm196, %v528, 0
    %532 = vmatpush.bf16.msra.mxu0 0
    %533 = vmatpush.bf16.msra.mxu0 0
    %534 = vmatpush.bf16.msra.mxu0 0
    %535 = vmatpush.bf16.msra.mxu0 0
    %536 = vmatpush.bf16.msra.mxu0 %v54
    %537 = vmatpush.bf16.msra.mxu0 %v52
    %538 = vmatpush.bf16.msra.mxu0 %v50
    %539 = vmatpush.bf16.msra.mxu0 %v48
    %540 = vmatmul.bf16.gmra.mxu0 %v530
    %v541 = vpop.f32.mrf.mxu0
    %v542 = vadd.f32 0.0, %v541
    %v543 = vpop.f32.mrf.mxu0
    %544 = vdwg.mxu0
    %545 = vmatpush.bf16.msra.mxu0 0
    %546 = vmatpush.bf16.msra.mxu0 0
    %547 = vmatpush.bf16.msra.mxu0 0
    %548 = vmatpush.bf16.msra.mxu0 0
    %549 = vmatpush.bf16.msra.mxu0 %v55
    %550 = vmatpush.bf16.msra.mxu0 %v53
    %551 = vmatpush.bf16.msra.mxu0 %v51
    %552 = vmatpush.bf16.msra.mxu0 %v49
    %553 = vmatmul.bf16.gmra.mxu0 %v530
    %v554 = vpop.f32.mrf.mxu0
    %v555 = vadd.f32 0.0, %v554
    %v556 = vpop.f32.mrf.mxu0
    %557 = vdwg.mxu0
    %v558 = vadd.f32 %v144, %v542
    %v559 = vadd.f32 %v185, %v555
    %v560 = vxor.u32 %v558, 2147483648
    %v561 = vxor.u32 %v559, 2147483648
    %v562 = vmul.f32 %v560, 1.442695
    %v563 = vpow.pop %v562
    %v564 = vmul.f32 %v561, 1.442695
    %v565 = vpow.pop %v564
    %v566 = vadd.f32 %v563, 1.0
    %v567 = vadd.f32 %v565, 1.0
    %v568 = vrcp.pop %v566
    %v569 = vmul.f32 %v566, %v568
    %v570 = vsub.f32 1.0, %v569
    %v571 = vmul.f32 %v568, %v570
    %v572 = vadd.f32 %v568, %v571
    %vm573 = vweird.f32 %v566
    %vm574 = vweird.f32 %v568
    %vm575 = vmor %vm573, %vm574
    %v576 = vsel %vm575, %v568, %v572
    %v577 = vand.u32 2147483647, %v566
    %vm578 = vcmp.eq.f32.partialorder %v577, 8.507059e+37
    %v579 = vand.u32 %v566, 2147483648
    %v580 = vor.u32 1.1754944e-38, %v579
    %v581 = vsel %vm578, %v580, %v576
    %v582 = vmul.f32 1.0, %v581
    %v583 = vrcp.pop %v567
    %v584 = vmul.f32 %v567, %v583
    %v585 = vsub.f32 1.0, %v584
    %v586 = vmul.f32 %v583, %v585
    %v587 = vadd.f32 %v583, %v586
    %vm588 = vweird.f32 %v567
    %vm589 = vweird.f32 %v583
    %vm590 = vmor %vm588, %vm589
    %v591 = vsel %vm590, %v583, %v587
    %v592 = vand.u32 2147483647, %v567
    %vm593 = vcmp.eq.f32.partialorder %v592, 8.507059e+37
    %v594 = vand.u32 %v567, 2147483648
    %v595 = vor.u32 1.1754944e-38, %v594
    %v596 = vsel %vm593, %v595, %v591
    %v597 = vmul.f32 1.0, %v596
    %v598 = vtanh.pop %v559
    %v599 = vmul.f32 %v582, %v522
    %v600 = vmul.f32 %v582, %v598
    %602 = vrot.lane.b32.xlu0 %v600, 64
    %v603 = vpop.permute.xlu0 %602
    %v605 = vadd.f32 %v599, %v603
    %v606 = vtanh.pop %v605
    %v607 = vmul.f32 %v597, %v606
    %v608 = vpack.c.bf16 %v607, %v607
    %610 = vrot.lane.b32.xlu0 %v608, 64
    %v611 = vpop.permute.xlu0 %610
    %v613 = vsel %vm196, %v611, 0
    %615 = vmatpush.bf16.msra.mxu0 0
    %616 = vmatpush.bf16.msra.mxu0 0
    %617 = vmatpush.bf16.msra.mxu0 0
    %618 = vmatpush.bf16.msra.mxu0 0
    %619 = vmatpush.bf16.msra.mxu0 %v54
    %620 = vmatpush.bf16.msra.mxu0 %v52
    %621 = vmatpush.bf16.msra.mxu0 %v50
    %622 = vmatpush.bf16.msra.mxu0 %v48
    %623 = vmatmul.bf16.gmra.mxu0 %v613
    %v624 = vpop.f32.mrf.mxu0
    %v625 = vadd.f32 0.0, %v624
    %v626 = vpop.f32.mrf.mxu0
    %627 = vdwg.mxu0
    %628 = vmatpush.bf16.msra.mxu0 0
    %629 = vmatpush.bf16.msra.mxu0 0
    %630 = vmatpush.bf16.msra.mxu0 0
    %631 = vmatpush.bf16.msra.mxu0 0
    %632 = vmatpush.bf16.msra.mxu0 %v55
    %633 = vmatpush.bf16.msra.mxu0 %v53
    %634 = vmatpush.bf16.msra.mxu0 %v51
    %635 = vmatpush.bf16.msra.mxu0 %v49
    %636 = vmatmul.bf16.gmra.mxu0 %v613
    %v637 = vpop.f32.mrf.mxu0
    %v638 = vadd.f32 0.0, %v637
    %v639 = vpop.f32.mrf.mxu0
    %640 = vdwg.mxu0
    %v641 = vadd.f32 %v147, %v625
    %v642 = vadd.f32 %v188, %v638
    %v643 = vxor.u32 %v641, 2147483648
    %v644 = vxor.u32 %v642, 2147483648
    %v645 = vmul.f32 %v643, 1.442695
    %v646 = vpow.pop %v645
    %v647 = vmul.f32 %v644, 1.442695
    %v648 = vpow.pop %v647
    %v649 = vadd.f32 %v646, 1.0
    %v650 = vadd.f32 %v648, 1.0
    %v651 = vrcp.pop %v649
    %v652 = vmul.f32 %v649, %v651
    %v653 = vsub.f32 1.0, %v652
    %v654 = vmul.f32 %v651, %v653
    %v655 = vadd.f32 %v651, %v654
    %vm656 = vweird.f32 %v649
    %vm657 = vweird.f32 %v651
    %vm658 = vmor %vm656, %vm657
    %v659 = vsel %vm658, %v651, %v655
    %v660 = vand.u32 2147483647, %v649
    %vm661 = vcmp.eq.f32.partialorder %v660, 8.507059e+37
    %v662 = vand.u32 %v649, 2147483648
    %v663 = vor.u32 1.1754944e-38, %v662
    %v664 = vsel %vm661, %v663, %v659
    %v665 = vmul.f32 1.0, %v664
    %v666 = vrcp.pop %v650
    %v667 = vmul.f32 %v650, %v666
    %v668 = vsub.f32 1.0, %v667
    %v669 = vmul.f32 %v666, %v668
    %v670 = vadd.f32 %v666, %v669
    %vm671 = vweird.f32 %v650
    %vm672 = vweird.f32 %v666
    %vm673 = vmor %vm671, %vm672
    %v674 = vsel %vm673, %v666, %v670
    %v675 = vand.u32 2147483647, %v650
    %vm676 = vcmp.eq.f32.partialorder %v675, 8.507059e+37
    %v677 = vand.u32 %v650, 2147483648
    %v678 = vor.u32 1.1754944e-38, %v677
    %v679 = vsel %vm676, %v678, %v674
    %v680 = vmul.f32 1.0, %v679
    %v681 = vtanh.pop %v642
    %v682 = vmul.f32 %v665, %v605
    %v683 = vmul.f32 %v665, %v681
    %685 = vrot.lane.b32.xlu0 %v683, 64
    %v686 = vpop.permute.xlu0 %685
    %v688 = vadd.f32 %v682, %v686
    %v689 = vtanh.pop %v688
    %v690 = vmul.f32 %v680, %v689
    %v691 = vpack.c.bf16 %v690, %v690
    %693 = vrot.lane.b32.xlu0 %v691, 64
    %v694 = vpop.permute.xlu0 %693
    %v696 = vsel %vm196, %v694, 0
    %698 = vmatpush.bf16.msra.mxu0 0
    %699 = vmatpush.bf16.msra.mxu0 0
    %700 = vmatpush.bf16.msra.mxu0 0
    %701 = vmatpush.bf16.msra.mxu0 0
    %702 = vmatpush.bf16.msra.mxu0 %v54
    %703 = vmatpush.bf16.msra.mxu0 %v52
    %704 = vmatpush.bf16.msra.mxu0 %v50
    %705 = vmatpush.bf16.msra.mxu0 %v48
    %706 = vmatmul.bf16.gmra.mxu0 %v696
    %v707 = vpop.f32.mrf.mxu0
    %v708 = vadd.f32 0.0, %v707
    %v709 = vpop.f32.mrf.mxu0
    %710 = vdwg.mxu0
    %711 = vmatpush.bf16.msra.mxu0 0
    %712 = vmatpush.bf16.msra.mxu0 0
    %713 = vmatpush.bf16.msra.mxu0 0
    %714 = vmatpush.bf16.msra.mxu0 0
    %715 = vmatpush.bf16.msra.mxu0 %v55
    %716 = vmatpush.bf16.msra.mxu0 %v53
    %717 = vmatpush.bf16.msra.mxu0 %v51
    %718 = vmatpush.bf16.msra.mxu0 %v49
    %719 = vmatmul.bf16.gmra.mxu0 %v696
    %v720 = vpop.f32.mrf.mxu0
    %v721 = vadd.f32 0.0, %v720
    %v722 = vpop.f32.mrf.mxu0
    %723 = vdwg.mxu0
    %v724 = vadd.f32 %v150, %v708
    %v725 = vadd.f32 %v191, %v721
    %v726 = vxor.u32 %v724, 2147483648
    %v727 = vxor.u32 %v725, 2147483648
    %v728 = vmul.f32 %v726, 1.442695
    %v729 = vpow.pop %v728
    %v730 = vmul.f32 %v727, 1.442695
    %v731 = vpow.pop %v730
    %v732 = vadd.f32 %v729, 1.0
    %v733 = vadd.f32 %v731, 1.0
    %v734 = vrcp.pop %v732
    %v735 = vmul.f32 %v732, %v734
    %v736 = vsub.f32 1.0, %v735
    %v737 = vmul.f32 %v734, %v736
    %v738 = vadd.f32 %v734, %v737
    %vm739 = vweird.f32 %v732
    %vm740 = vweird.f32 %v734
    %vm741 = vmor %vm739, %vm740
    %v742 = vsel %vm741, %v734, %v738
    %v743 = vand.u32 2147483647, %v732
    %vm744 = vcmp.eq.f32.partialorder %v743, 8.507059e+37
    %v745 = vand.u32 %v732, 2147483648
    %v746 = vor.u32 1.1754944e-38, %v745
    %v747 = vsel %vm744, %v746, %v742
    %v748 = vmul.f32 1.0, %v747
    %v749 = vrcp.pop %v733
    %v750 = vmul.f32 %v733, %v749
    %v751 = vsub.f32 1.0, %v750
    %v752 = vmul.f32 %v749, %v751
    %v753 = vadd.f32 %v749, %v752
    %vm754 = vweird.f32 %v733
    %vm755 = vweird.f32 %v749
    %vm756 = vmor %vm754, %vm755
    %v757 = vsel %vm756, %v749, %v753
    %v758 = vand.u32 2147483647, %v733
    %vm759 = vcmp.eq.f32.partialorder %v758, 8.507059e+37
    %v760 = vand.u32 %v733, 2147483648
    %v761 = vor.u32 1.1754944e-38, %v760
    %v762 = vsel %vm759, %v761, %v757
    %v763 = vmul.f32 1.0, %v762
    %v764 = vtanh.pop %v725
    %v765 = vmul.f32 %v748, %v688
    %v766 = vmul.f32 %v748, %v764
    %768 = vrot.lane.b32.xlu0 %v766, 64
    %v769 = vpop.permute.xlu0 %768
    %v771 = vadd.f32 %v765, %v769
    %v772 = vtanh.pop %v771
    %v773 = vmul.f32 %v763, %v772
    %v774 = vpack.c.bf16 %v773, %v773
    %776 = vrot.lane.b32.xlu0 %v774, 64
    %v777 = vpop.permute.xlu0 %776
    %v779 = vsel %vm196, %v777, 0
    %781 = vmatpush.bf16.msra.mxu0 0
    %782 = vmatpush.bf16.msra.mxu0 0
    %783 = vmatpush.bf16.msra.mxu0 0
    %784 = vmatpush.bf16.msra.mxu0 0
    %785 = vmatpush.bf16.msra.mxu0 %v54
    %786 = vmatpush.bf16.msra.mxu0 %v52
    %787 = vmatpush.bf16.msra.mxu0 %v50
    %788 = vmatpush.bf16.msra.mxu0 %v48
    %789 = vmatmul.bf16.gmra.mxu0 %v779
    %v790 = vpop.f32.mrf.mxu0
    %v791 = vadd.f32 0.0, %v790
    %v792 = vpop.f32.mrf.mxu0
    %793 = vdwg.mxu0
    %794 = vmatpush.bf16.msra.mxu0 0
    %795 = vmatpush.bf16.msra.mxu0 0
    %796 = vmatpush.bf16.msra.mxu0 0
    %797 = vmatpush.bf16.msra.mxu0 0
    %798 = vmatpush.bf16.msra.mxu0 %v55
    %799 = vmatpush.bf16.msra.mxu0 %v53
    %800 = vmatpush.bf16.msra.mxu0 %v51
    %801 = vmatpush.bf16.msra.mxu0 %v49
    %802 = vmatmul.bf16.gmra.mxu0 %v779
    %v803 = vpop.f32.mrf.mxu0
    %v804 = vadd.f32 0.0, %v803
    %v805 = vpop.f32.mrf.mxu0
    %806 = vdwg.mxu0
    %v807 = vadd.f32 %v153, %v791
    %v808 = vadd.f32 %v194, %v804
    %v809 = vxor.u32 %v807, 2147483648
    %v810 = vxor.u32 %v808, 2147483648
    %v811 = vmul.f32 %v809, 1.442695
    %v812 = vpow.pop %v811
    %v813 = vmul.f32 %v810, 1.442695
    %v814 = vpow.pop %v813
    %v815 = vadd.f32 %v812, 1.0
    %v816 = vadd.f32 %v814, 1.0
    %v817 = vrcp.pop %v815
    %v818 = vmul.f32 %v815, %v817
    %v819 = vsub.f32 1.0, %v818
    %v820 = vmul.f32 %v817, %v819
    %v821 = vadd.f32 %v817, %v820
    %vm822 = vweird.f32 %v815
    %vm823 = vweird.f32 %v817
    %vm824 = vmor %vm822, %vm823
    %v825 = vsel %vm824, %v817, %v821
    %v826 = vand.u32 2147483647, %v815
    %vm827 = vcmp.eq.f32.partialorder %v826, 8.507059e+37
    %v828 = vand.u32 %v815, 2147483648
    %v829 = vor.u32 1.1754944e-38, %v828
    %v830 = vsel %vm827, %v829, %v825
    %v831 = vmul.f32 1.0, %v830
    %v832 = vrcp.pop %v816
    %v833 = vmul.f32 %v816, %v832
    %v834 = vsub.f32 1.0, %v833
    %v835 = vmul.f32 %v832, %v834
    %v836 = vadd.f32 %v832, %v835
    %vm837 = vweird.f32 %v816
    %vm838 = vweird.f32 %v832
    %vm839 = vmor %vm837, %vm838
    %v840 = vsel %vm839, %v832, %v836
    %v841 = vand.u32 2147483647, %v816
    %vm842 = vcmp.eq.f32.partialorder %v841, 8.507059e+37
    %v843 = vand.u32 %v816, 2147483648
    %v844 = vor.u32 1.1754944e-38, %v843
    %v845 = vsel %vm842, %v844, %v840
    %v846 = vmul.f32 1.0, %v845
    %v847 = vtanh.pop %v808
    %v848 = vmul.f32 %v831, %v771
    %v849 = vmul.f32 %v831, %v847
    %851 = vrot.lane.b32.xlu0 %v849, 64
    %v852 = vpop.permute.xlu0 %851
    %v854 = vadd.f32 %v848, %v852
    %v855 = vtanh.pop %v854
    %v856 = vmul.f32 %v846, %v855
    %858 = vrot.lane.b32.xlu0 %v856, 64
    %v859 = vpop.permute.xlu0 %858
    %v860 = vsel %vm196, %v859, 0
    %862 = vmatpush.msra.mxu0 0.0
    %863 = vmatpush.msra.mxu0 0.0
    %864 = vmatpush.msra.mxu0 0.0
    %865 = vmatpush.msra.mxu0 0.0
    %866 = vmatpush.msra.mxu0 0.0
    %867 = vmatpush.msra.mxu0 0.0
    %868 = vmatpush.msra.mxu0 0.0
    %869 = vmatpush.msra.mxu0 0.0
    %870 = vmatpush.msra.mxu0 %v65
    %871 = vmatpush.msra.mxu0 %v64
    %872 = vmatpush.msra.mxu0 %v63
    %873 = vmatpush.msra.mxu0 %v62
    %874 = vmatpush.msra.mxu0 %v61
    %875 = vmatpush.msra.mxu0 %v60
    %876 = vmatpush.msra.mxu0 %v59
    %877 = vmatpush.msra.mxu0 %v58
    %878 = vmatmul.f32.gmra.mxu0 %v860
    %v879 = vpop.f32.mrf.mxu0
    %v880 = vadd.f32 %v66, %v879
    %881 = vdwg.mxu0
    %vm882 = vcmask 261120
    %v884 = vsel %vm882, %v880, 0
    %886 = vmatpush.msra.mxu0 0.0
    %887 = vmatpush.msra.mxu0 0.0
    %888 = vmatpush.msra.mxu0 0.0
    %889 = vmatpush.msra.mxu0 0.0
    %890 = vmatpush.msra.mxu0 0.0
    %891 = vmatpush.msra.mxu0 0.0
    %892 = vmatpush.msra.mxu0 0.0
    %893 = vmatpush.msra.mxu0 0.0
    %894 = vmatpush.msra.mxu0 0.0
    %895 = vmatpush.msra.mxu0 0.0
    %896 = vmatpush.msra.mxu0 0.0
    %897 = vmatpush.msra.mxu0 0.0
    %898 = vmatpush.msra.mxu0 %v70
    %899 = vmatpush.msra.mxu0 %v69
    %900 = vmatpush.msra.mxu0 %v68
    %901 = vmatpush.msra.mxu0 %v67
    %902 = vmatmul.f32.gmra.mxu0 %v884
    %v903 = vpop.f32.mrf.mxu0
    %v904 = vadd.f32 %v71, %v903
    %905 = vdwg.mxu0
    %v906 = vpack.c.bf16 %v904, %v904
    %v908 = vsel %vm89, %v906, 0
    %910 = vmatpush.bf16.msra.mxu0 0
    %911 = vmatpush.bf16.msra.mxu0 0
    %912 = vmatpush.bf16.msra.mxu0 0
    %913 = vmatpush.bf16.msra.mxu0 0
    %914 = vmatpush.bf16.msra.mxu0 0
    %915 = vmatpush.bf16.msra.mxu0 0
    %916 = vmatpush.bf16.msra.mxu0 0
    %917 = vmatpush.bf16.msra.mxu0 %v74
    %918 = vmatmul.bf16.gmra.mxu0 %v908
    %v919 = vpop.f32.mrf.mxu0
    %v920 = vadd.f32 %v75, %v919
    %v921 = vpop.f32.mrf.mxu0
    %922 = vdwg.mxu0
    %v923 = vxor.u32 %v920, 2147483648
    %v924 = vmul.f32 %v923, 1.442695
    %v925 = vpow.pop %v924
    %v926 = vadd.f32 %v925, 1.0
    %v927 = vrcp.pop %v926
    %v928 = vmul.f32 %v926, %v927
    %v929 = vsub.f32 1.0, %v928
    %v930 = vmul.f32 %v927, %v929
    %v931 = vadd.f32 %v927, %v930
    %vm932 = vweird.f32 %v926
    %vm933 = vweird.f32 %v927
    %vm934 = vmor %vm932, %vm933
    %v935 = vsel %vm934, %v927, %v931
    %v936 = vand.u32 2147483647, %v926
    %vm937 = vcmp.eq.f32.partialorder %v936, 8.507059e+37
    %v938 = vand.u32 %v926, 2147483648
    %v939 = vor.u32 1.1754944e-38, %v938
    %v940 = vsel %vm937, %v939, %v935
    %v941 = vmul.f32 1.0, %v940
    %v942 = vtanh.pop %v920
    %v943 = vmul.f32 %v941, 0.0
    %945 = vrot.lane.b32.xlu0 %v942, 96
    %v946 = vpop.permute.xlu0 %945
    %v948 = vmul.f32 %v941, %v946
    %950 = vrot.lane.b32.xlu0 %v948, 16
    %v951 = vpop.permute.xlu0 %950
    %v953 = vadd.f32 %v943, %v951
    %v954 = vtanh.pop %v953
    %956 = vrot.lane.b32.xlu0 %v954, 32
    %v957 = vpop.permute.xlu0 %956
    %v959 = vmul.f32 %v941, %v957
    %v960 = vpack.c.bf16 %v959, %v959
    %962 = vrot.lane.b32.xlu0 %v960, 80
    %v963 = vpop.permute.xlu0 %962
    %v965 = vsel %vm89, %v963, 0
    %967 = vmatpush.bf16.msra.mxu0 0
    %968 = vmatpush.bf16.msra.mxu0 0
    %969 = vmatpush.bf16.msra.mxu0 0
    %970 = vmatpush.bf16.msra.mxu0 0
    %971 = vmatpush.bf16.msra.mxu0 0
    %972 = vmatpush.bf16.msra.mxu0 0
    %973 = vmatpush.bf16.msra.mxu0 0
    %974 = vmatpush.bf16.msra.mxu0 %v74
    %975 = vmatmul.bf16.gmra.mxu0 %v965
    %v976 = vpop.f32.mrf.mxu0
    %v977 = vadd.f32 %v75, %v976
    %v978 = vpop.f32.mrf.mxu0
    %979 = vdwg.mxu0
    %v980 = vxor.u32 %v977, 2147483648
    %v981 = vmul.f32 %v980, 1.442695
    %v982 = vpow.pop %v981
    %v983 = vadd.f32 %v982, 1.0
    %v984 = vrcp.pop %v983
    %v985 = vmul.f32 %v983, %v984
    %v986 = vsub.f32 1.0, %v985
    %v987 = vmul.f32 %v984, %v986
    %v988 = vadd.f32 %v984, %v987
    %vm989 = vweird.f32 %v983
    %vm990 = vweird.f32 %v984
    %vm991 = vmor %vm989, %vm990
    %v992 = vsel %vm991, %v984, %v988
    %v993 = vand.u32 2147483647, %v983
    %vm994 = vcmp.eq.f32.partialorder %v993, 8.507059e+37
    %v995 = vand.u32 %v983, 2147483648
    %v996 = vor.u32 1.1754944e-38, %v995
    %v997 = vsel %vm994, %v996, %v992
    %v998 = vmul.f32 1.0, %v997
    %v999 = vtanh.pop %v977
    %v1000 = vmul.f32 %v998, %v953
    %1002 = vrot.lane.b32.xlu0 %v999, 96
    %v1003 = vpop.permute.xlu0 %1002
    %v1005 = vmul.f32 %v998, %v1003
    %1007 = vrot.lane.b32.xlu0 %v1005, 16
    %v1008 = vpop.permute.xlu0 %1007
    %v1010 = vadd.f32 %v1000, %v1008
    %v1011 = vtanh.pop %v1010
    %1013 = vrot.lane.b32.xlu0 %v1011, 32
    %v1014 = vpop.permute.xlu0 %1013
    %v1016 = vmul.f32 %v998, %v1014
    %v1017 = vpack.c.bf16 %v1016, %v1016
    %1019 = vrot.lane.b32.xlu0 %v1017, 80
    %v1020 = vpop.permute.xlu0 %1019
    %v1022 = vsel %vm89, %v1020, 0
    %1024 = vmatpush.bf16.msra.mxu0 0
    %1025 = vmatpush.bf16.msra.mxu0 0
    %1026 = vmatpush.bf16.msra.mxu0 0
    %1027 = vmatpush.bf16.msra.mxu0 0
    %1028 = vmatpush.bf16.msra.mxu0 0
    %1029 = vmatpush.bf16.msra.mxu0 0
    %1030 = vmatpush.bf16.msra.mxu0 0
    %1031 = vmatpush.bf16.msra.mxu0 %v74
    %1032 = vmatmul.bf16.gmra.mxu0 %v1022
    %v1033 = vpop.f32.mrf.mxu0
    %v1034 = vadd.f32 %v75, %v1033
    %v1035 = vpop.f32.mrf.mxu0
    %1036 = vdwg.mxu0
    %v1037 = vxor.u32 %v1034, 2147483648
    %v1038 = vmul.f32 %v1037, 1.442695
    %v1039 = vpow.pop %v1038
    %v1040 = vadd.f32 %v1039, 1.0
    %v1041 = vrcp.pop %v1040
    %v1042 = vmul.f32 %v1040, %v1041
    %v1043 = vsub.f32 1.0, %v1042
    %v1044 = vmul.f32 %v1041, %v1043
    %v1045 = vadd.f32 %v1041, %v1044
    %vm1046 = vweird.f32 %v1040
    %vm1047 = vweird.f32 %v1041
    %vm1048 = vmor %vm1046, %vm1047
    %v1049 = vsel %vm1048, %v1041, %v1045
    %v1050 = vand.u32 2147483647, %v1040
    %vm1051 = vcmp.eq.f32.partialorder %v1050, 8.507059e+37
    %v1052 = vand.u32 %v1040, 2147483648
    %v1053 = vor.u32 1.1754944e-38, %v1052
    %v1054 = vsel %vm1051, %v1053, %v1049
    %v1055 = vmul.f32 1.0, %v1054
    %v1056 = vtanh.pop %v1034
    %v1057 = vmul.f32 %v1055, %v1010
    %1059 = vrot.lane.b32.xlu0 %v1056, 96
    %v1060 = vpop.permute.xlu0 %1059
    %v1062 = vmul.f32 %v1055, %v1060
    %1064 = vrot.lane.b32.xlu0 %v1062, 16
    %v1065 = vpop.permute.xlu0 %1064
    %v1067 = vadd.f32 %v1057, %v1065
    %v1068 = vtanh.pop %v1067
    %1070 = vrot.lane.b32.xlu0 %v1068, 32
    %v1071 = vpop.permute.xlu0 %1070
    %v1073 = vmul.f32 %v1055, %v1071
    %v1074 = vpack.c.bf16 %v1073, %v1073
    %1076 = vrot.lane.b32.xlu0 %v1074, 80
    %v1077 = vpop.permute.xlu0 %1076
    %v1079 = vsel %vm89, %v1077, 0
    %1081 = vmatpush.bf16.msra.mxu0 0
    %1082 = vmatpush.bf16.msra.mxu0 0
    %1083 = vmatpush.bf16.msra.mxu0 0
    %1084 = vmatpush.bf16.msra.mxu0 0
    %1085 = vmatpush.bf16.msra.mxu0 0
    %1086 = vmatpush.bf16.msra.mxu0 0
    %1087 = vmatpush.bf16.msra.mxu0 0
    %1088 = vmatpush.bf16.msra.mxu0 %v74
    %1089 = vmatmul.bf16.gmra.mxu0 %v1079
    %v1090 = vpop.f32.mrf.mxu0
    %v1091 = vadd.f32 %v75, %v1090
    %v1092 = vpop.f32.mrf.mxu0
    %1093 = vdwg.mxu0
    %v1094 = vxor.u32 %v1091, 2147483648
    %v1095 = vmul.f32 %v1094, 1.442695
    %v1096 = vpow.pop %v1095
    %v1097 = vadd.f32 %v1096, 1.0
    %v1098 = vrcp.pop %v1097
    %v1099 = vmul.f32 %v1097, %v1098
    %v1100 = vsub.f32 1.0, %v1099
    %v1101 = vmul.f32 %v1098, %v1100
    %v1102 = vadd.f32 %v1098, %v1101
    %vm1103 = vweird.f32 %v1097
    %vm1104 = vweird.f32 %v1098
    %vm1105 = vmor %vm1103, %vm1104
    %v1106 = vsel %vm1105, %v1098, %v1102
    %v1107 = vand.u32 2147483647, %v1097
    %vm1108 = vcmp.eq.f32.partialorder %v1107, 8.507059e+37
    %v1109 = vand.u32 %v1097, 2147483648
    %v1110 = vor.u32 1.1754944e-38, %v1109
    %v1111 = vsel %vm1108, %v1110, %v1106
    %v1112 = vmul.f32 1.0, %v1111
    %v1113 = vtanh.pop %v1091
    %v1114 = vmul.f32 %v1112, %v1067
    %1116 = vrot.lane.b32.xlu0 %v1113, 96
    %v1117 = vpop.permute.xlu0 %1116
    %v1119 = vmul.f32 %v1112, %v1117
    %1121 = vrot.lane.b32.xlu0 %v1119, 16
    %v1122 = vpop.permute.xlu0 %1121
    %v1124 = vadd.f32 %v1114, %v1122
    %v1125 = vtanh.pop %v1124
    %1127 = vrot.lane.b32.xlu0 %v1125, 32
    %v1128 = vpop.permute.xlu0 %1127
    %v1130 = vmul.f32 %v1112, %v1128
    %v1131 = vpack.c.bf16 %v1130, %v1130
    %1133 = vrot.lane.b32.xlu0 %v1131, 80
    %v1134 = vpop.permute.xlu0 %1133
    %v1136 = vsel %vm89, %v1134, 0
    %1138 = vmatpush.bf16.msra.mxu0 0
    %1139 = vmatpush.bf16.msra.mxu0 0
    %1140 = vmatpush.bf16.msra.mxu0 0
    %1141 = vmatpush.bf16.msra.mxu0 0
    %1142 = vmatpush.bf16.msra.mxu0 0
    %1143 = vmatpush.bf16.msra.mxu0 0
    %1144 = vmatpush.bf16.msra.mxu0 0
    %1145 = vmatpush.bf16.msra.mxu0 %v74
    %1146 = vmatmul.bf16.gmra.mxu0 %v1136
    %v1147 = vpop.f32.mrf.mxu0
    %v1148 = vadd.f32 %v75, %v1147
    %v1149 = vpop.f32.mrf.mxu0
    %1150 = vdwg.mxu0
    %v1151 = vxor.u32 %v1148, 2147483648
    %v1152 = vmul.f32 %v1151, 1.442695
    %v1153 = vpow.pop %v1152
    %v1154 = vadd.f32 %v1153, 1.0
    %v1155 = vrcp.pop %v1154
    %v1156 = vmul.f32 %v1154, %v1155
    %v1157 = vsub.f32 1.0, %v1156
    %v1158 = vmul.f32 %v1155, %v1157
    %v1159 = vadd.f32 %v1155, %v1158
    %vm1160 = vweird.f32 %v1154
    %vm1161 = vweird.f32 %v1155
    %vm1162 = vmor %vm1160, %vm1161
    %v1163 = vsel %vm1162, %v1155, %v1159
    %v1164 = vand.u32 2147483647, %v1154
    %vm1165 = vcmp.eq.f32.partialorder %v1164, 8.507059e+37
    %v1166 = vand.u32 %v1154, 2147483648
    %v1167 = vor.u32 1.1754944e-38, %v1166
    %v1168 = vsel %vm1165, %v1167, %v1163
    %v1169 = vmul.f32 1.0, %v1168
    %v1170 = vtanh.pop %v1148
    %v1171 = vmul.f32 %v1169, %v1124
    %1173 = vrot.lane.b32.xlu0 %v1170, 96
    %v1174 = vpop.permute.xlu0 %1173
    %v1176 = vmul.f32 %v1169, %v1174
    %1178 = vrot.lane.b32.xlu0 %v1176, 16
    %v1179 = vpop.permute.xlu0 %1178
    %v1181 = vadd.f32 %v1171, %v1179
    %v1182 = vtanh.pop %v1181
    %1184 = vrot.lane.b32.xlu0 %v1182, 32
    %v1185 = vpop.permute.xlu0 %1184
    %v1187 = vmul.f32 %v1169, %v1185
    %v1188 = vpack.c.bf16 %v1187, %v1187
    %1190 = vrot.lane.b32.xlu0 %v1188, 80
    %v1191 = vpop.permute.xlu0 %1190
    %v1193 = vsel %vm89, %v1191, 0
    %1195 = vmatpush.bf16.msra.mxu0 0
    %1196 = vmatpush.bf16.msra.mxu0 0
    %1197 = vmatpush.bf16.msra.mxu0 0
    %1198 = vmatpush.bf16.msra.mxu0 0
    %1199 = vmatpush.bf16.msra.mxu0 0
    %1200 = vmatpush.bf16.msra.mxu0 0
    %1201 = vmatpush.bf16.msra.mxu0 0
    %1202 = vmatpush.bf16.msra.mxu0 %v74
    %1203 = vmatmul.bf16.gmra.mxu0 %v1193
    %v1204 = vpop.f32.mrf.mxu0
    %v1205 = vadd.f32 %v75, %v1204
    %v1206 = vpop.f32.mrf.mxu0
    %1207 = vdwg.mxu0
    %v1208 = vxor.u32 %v1205, 2147483648
    %v1209 = vmul.f32 %v1208, 1.442695
    %v1210 = vpow.pop %v1209
    %v1211 = vadd.f32 %v1210, 1.0
    %v1212 = vrcp.pop %v1211
    %v1213 = vmul.f32 %v1211, %v1212
    %v1214 = vsub.f32 1.0, %v1213
    %v1215 = vmul.f32 %v1212, %v1214
    %v1216 = vadd.f32 %v1212, %v1215
    %vm1217 = vweird.f32 %v1211
    %vm1218 = vweird.f32 %v1212
    %vm1219 = vmor %vm1217, %vm1218
    %v1220 = vsel %vm1219, %v1212, %v1216
    %v1221 = vand.u32 2147483647, %v1211
    %vm1222 = vcmp.eq.f32.partialorder %v1221, 8.507059e+37
    %v1223 = vand.u32 %v1211, 2147483648
    %v1224 = vor.u32 1.1754944e-38, %v1223
    %v1225 = vsel %vm1222, %v1224, %v1220
    %v1226 = vmul.f32 1.0, %v1225
    %v1227 = vtanh.pop %v1205
    %v1228 = vmul.f32 %v1226, %v1181
    %1230 = vrot.lane.b32.xlu0 %v1227, 96
    %v1231 = vpop.permute.xlu0 %1230
    %v1233 = vmul.f32 %v1226, %v1231
    %1235 = vrot.lane.b32.xlu0 %v1233, 16
    %v1236 = vpop.permute.xlu0 %1235
    %v1238 = vadd.f32 %v1228, %v1236
    %v1239 = vtanh.pop %v1238
    %1241 = vrot.lane.b32.xlu0 %v1239, 32
    %v1242 = vpop.permute.xlu0 %1241
    %v1244 = vmul.f32 %v1226, %v1242
    %v1245 = vpack.c.bf16 %v1244, %v1244
    %1247 = vrot.lane.b32.xlu0 %v1245, 80
    %v1248 = vpop.permute.xlu0 %1247
    %v1250 = vsel %vm89, %v1248, 0
    %1252 = vmatpush.bf16.msra.mxu0 0
    %1253 = vmatpush.bf16.msra.mxu0 0
    %1254 = vmatpush.bf16.msra.mxu0 0
    %1255 = vmatpush.bf16.msra.mxu0 0
    %1256 = vmatpush.bf16.msra.mxu0 0
    %1257 = vmatpush.bf16.msra.mxu0 0
    %1258 = vmatpush.bf16.msra.mxu0 0
    %1259 = vmatpush.bf16.msra.mxu0 %v74
    %1260 = vmatmul.bf16.gmra.mxu0 %v1250
    %v1261 = vpop.f32.mrf.mxu0
    %v1262 = vadd.f32 %v75, %v1261
    %v1263 = vpop.f32.mrf.mxu0
    %1264 = vdwg.mxu0
    %v1265 = vxor.u32 %v1262, 2147483648
    %v1266 = vmul.f32 %v1265, 1.442695
    %v1267 = vpow.pop %v1266
    %v1268 = vadd.f32 %v1267, 1.0
    %v1269 = vrcp.pop %v1268
    %v1270 = vmul.f32 %v1268, %v1269
    %v1271 = vsub.f32 1.0, %v1270
    %v1272 = vmul.f32 %v1269, %v1271
    %v1273 = vadd.f32 %v1269, %v1272
    %vm1274 = vweird.f32 %v1268
    %vm1275 = vweird.f32 %v1269
    %vm1276 = vmor %vm1274, %vm1275
    %v1277 = vsel %vm1276, %v1269, %v1273
    %v1278 = vand.u32 2147483647, %v1268
    %vm1279 = vcmp.eq.f32.partialorder %v1278, 8.507059e+37
    %v1280 = vand.u32 %v1268, 2147483648
    %v1281 = vor.u32 1.1754944e-38, %v1280
    %v1282 = vsel %vm1279, %v1281, %v1277
    %v1283 = vmul.f32 1.0, %v1282
    %v1284 = vtanh.pop %v1262
    %v1285 = vmul.f32 %v1283, %v1238
    %1287 = vrot.lane.b32.xlu0 %v1284, 96
    %v1288 = vpop.permute.xlu0 %1287
    %v1290 = vmul.f32 %v1283, %v1288
    %1292 = vrot.lane.b32.xlu0 %v1290, 16
    %v1293 = vpop.permute.xlu0 %1292
    %v1295 = vadd.f32 %v1285, %v1293
    %v1296 = vtanh.pop %v1295
    %1298 = vrot.lane.b32.xlu0 %v1296, 32
    %v1299 = vpop.permute.xlu0 %1298
    %v1301 = vmul.f32 %v1283, %v1299
    %v1302 = vpack.c.bf16 %v1301, %v1301
    %1304 = vrot.lane.b32.xlu0 %v1302, 80
    %v1305 = vpop.permute.xlu0 %1304
    %v1307 = vsel %vm89, %v1305, 0
    %1309 = vmatpush.bf16.msra.mxu0 0
    %1310 = vmatpush.bf16.msra.mxu0 0
    %1311 = vmatpush.bf16.msra.mxu0 0
    %1312 = vmatpush.bf16.msra.mxu0 0
    %1313 = vmatpush.bf16.msra.mxu0 0
    %1314 = vmatpush.bf16.msra.mxu0 0
    %1315 = vmatpush.bf16.msra.mxu0 0
    %1316 = vmatpush.bf16.msra.mxu0 %v74
    %1317 = vmatmul.bf16.gmra.mxu0 %v1307
    %v1318 = vpop.f32.mrf.mxu0
    %v1319 = vadd.f32 %v75, %v1318
    %v1320 = vpop.f32.mrf.mxu0
    %1321 = vdwg.mxu0
    %v1322 = vxor.u32 %v1319, 2147483648
    %v1323 = vmul.f32 %v1322, 1.442695
    %v1324 = vpow.pop %v1323
    %v1325 = vadd.f32 %v1324, 1.0
    %v1326 = vrcp.pop %v1325
    %v1327 = vmul.f32 %v1325, %v1326
    %v1328 = vsub.f32 1.0, %v1327
    %v1329 = vmul.f32 %v1326, %v1328
    %v1330 = vadd.f32 %v1326, %v1329
    %vm1331 = vweird.f32 %v1325
    %vm1332 = vweird.f32 %v1326
    %vm1333 = vmor %vm1331, %vm1332
    %v1334 = vsel %vm1333, %v1326, %v1330
    %v1335 = vand.u32 2147483647, %v1325
    %vm1336 = vcmp.eq.f32.partialorder %v1335, 8.507059e+37
    %v1337 = vand.u32 %v1325, 2147483648
    %v1338 = vor.u32 1.1754944e-38, %v1337
    %v1339 = vsel %vm1336, %v1338, %v1334
    %v1340 = vmul.f32 1.0, %v1339
    %v1341 = vtanh.pop %v1319
    %v1342 = vmul.f32 %v1340, %v1295
    %1344 = vrot.lane.b32.xlu0 %v1341, 96
    %v1345 = vpop.permute.xlu0 %1344
    %v1347 = vmul.f32 %v1340, %v1345
    %1349 = vrot.lane.b32.xlu0 %v1347, 16
    %v1350 = vpop.permute.xlu0 %1349
    %v1352 = vadd.f32 %v1342, %v1350
    %v1353 = vtanh.pop %v1352
    %1355 = vrot.lane.b32.xlu0 %v1353, 32
    %v1356 = vpop.permute.xlu0 %1355
    %v1358 = vmul.f32 %v1340, %v1356
    %1360 = vrot.lane.b32.xlu0 %v959, 80
    %v1361 = vpop.permute.xlu0 %1360
    %1364 = vrot.lane.b32.xlu0 %v1016, 96
    %v1365 = vpop.permute.xlu0 %1364
    %1368 = vrot.lane.b32.xlu0 %v1073, 112
    %v1369 = vpop.permute.xlu0 %1368
    %1372 = vrot.lane.b32.xlu0 %v1187, 16
    %v1373 = vpop.permute.xlu0 %1372
    %1376 = vrot.lane.b32.xlu0 %v1244, 32
    %v1377 = vpop.permute.xlu0 %1376
    %1380 = vrot.lane.b32.xlu0 %v1301, 48
    %v1381 = vpop.permute.xlu0 %1380
    %1384 = vrot.lane.b32.xlu0 %v1358, 64
    %v1385 = vpop.permute.xlu0 %1384
    %v1387 = vsel %vm89, %v1361, %v1365
    %v1388 = vsel %vm882, %v1387, %v1369
    %vm1389 = vcmask 392192
    %v1390 = vsel %vm1389, %v1388, %v1130
    %v1391 = vsel %vm196, %v1390, %v1373
    %vm1392 = vcmask 654336
    %v1393 = vsel %vm1392, %v1391, %v1377
    %vm1394 = vcmask 785408
    %v1395 = vsel %vm1394, %v1393, %v1381
    %vm1396 = vcmask 916480
    %v1397 = vsel %vm1396, %v1395, %v1385
    %1398 = vst [vmem:[%s2] sm:$0xff] %v1397
    // Predicated region
    $region14: #{forward.1} parent=1 // pred_check
      _
    $region15: #{forward.1} parent=1 // pred_check_branch
      %1400 = sbr.rel (0) target = $region17
    $region16: #{forward.1} parent=1 // pred_region
      _
    $region17: #{forward.1} parent=1 // pred_fallthru
      _
    // Predicated region
    $region18: #{forward.1} parent=1 // pred_check
      _
    $region19: #{forward.1} parent=1 // pred_check_branch
      %1402 = sbr.rel (0) target = $region21
    $region20: #{forward.1} parent=1 // pred_region
      _
    $region21: #{forward.1} parent=1 // pred_fallthru
      _
    %1403 = vsyncpa [#allocation3], 1

</llo_original>
